<compile_context>
chip_gen: v7x
topology: tpu7x:2x2x1
jax: 0.10.0
libtpu: 0.0.40
codegen_flags: <defaults>
</compile_context>

<pallas_src>
import jax
import jax.numpy as jnp
import numpy as np
from jax.experimental import pallas as pl
from jax.experimental.pallas import tpu as pltpu


def _ru8(n: int) -> int:
    """Round up to a multiple of 8 (sublane alignment for packed param rows)."""
    return (n + 7) // 8 * 8


def _lstm_fc_kernel(x_ref, hc0_ref, lstm_ref, fc_ref, out_ref, hc_ref):
    B, T, I = x_ref.shape
    H = hc0_ref.shape[-1]
    O = fc_ref.shape[-1]
    G = 4 * H

    # ---------------- Packed LSTM params (static, 8-aligned row slices) -----
    wih = lstm_ref[0:I, :]                     # (I, 4H)
    whh = lstm_ref[I:I + H, :]                 # (H, 4H)
    bias = lstm_ref[I + H:I + H + 1, :]        # (1, 4H)  = b_ih + b_hh

    # ------------- Hoisted input projection: ONE matmul for all B*T rows ----
    x_flat = x_ref[...].reshape(B * T, I)      # leading-dim collapse (layout-free)
    xp = jnp.dot(x_flat, wih, preferred_element_type=jnp.float32) + bias   # (B*T, 4H), batch-major

    # ---- Single-tanh activation constants: sigmoid(x) = 0.5 + 0.5*tanh(x/2) ----
    lane = jax.lax.broadcasted_iota(jnp.int32, (1, G), dimension=1)
    is_g = (lane >= 2 * H) & (lane < 3 * H)    # g gate band -> plain tanh
    pre = jnp.where(is_g, 1.0, 0.5).astype(jnp.float32)
    post = jnp.where(is_g, 1.0, 0.5).astype(jnp.float32)
    off = jnp.where(is_g, 0.0, 0.5).astype(jnp.float32)

    # ---------------- Recurrence: fully unrolled, vreg-resident state -------
    h = hc0_ref[0]                             # (B, H)
    c = hc0_ref[1]                             # (B, H)
    hs = []
    for t in range(T):
        # rows {b*T + t} of the vreg-resident projection (static slices + concat)
        xp_t = jnp.concatenate(
            [xp[b * T + t:b * T + t + 1, :] for b in range(B)], axis=0)     # (B, 4H)
        gates = xp_t + jnp.dot(h, whh, preferred_element_type=jnp.float32)
        act = off + post * jnp.tanh(gates * pre)                            # one EUP op / step
        i_g = act[:, 0 * H:1 * H]
        f_g = act[:, 1 * H:2 * H]
        g_g = act[:, 2 * H:3 * H]
        o_g = act[:, 3 * H:4 * H]
        c = f_g * c + i_g * g_g
        h = o_g * jnp.tanh(c)
        hs.append(h)

    hc_ref[0] = h
    hc_ref[1] = c

    # ------- FC epilogue: batch-major (B*T, H) slab, two matmuls, one store -----
    hs_bm = jnp.concatenate(
        [jnp.concatenate([hs[t][b:b + 1, :] for t in range(T)], axis=0) for b in range(B)],
        axis=0)                                                              # (B*T, H)

    r_fc1b = H
    r_fc2w = _ru8(H + 1)
    r_fc2b = _ru8(r_fc2w + O)
    fc1w = fc_ref[0:H, :]                      # (H, O)
    fc1b = fc_ref[r_fc1b:r_fc1b + 1, :]        # (1, O)
    fc2w = fc_ref[r_fc2w:r_fc2w + O, :]        # (O, O)
    fc2b = fc_ref[r_fc2b:r_fc2b + 1, :]        # (1, O)

    y = jnp.dot(hs_bm, fc1w, preferred_element_type=jnp.float32) + fc1b
    y = jnp.maximum(y, 0.0)
    y = jnp.dot(y, fc2w, preferred_element_type=jnp.float32) + fc2b
    out_ref[...] = y.astype(out_ref.dtype)     # (B*T, O); wrapper reshape is free


@jax.jit
def model_forward(X, states, params):
    """X: (B, T, I) f32; states = (h0, c0) each (1, B, H); returns (out, (hT, cT))."""
    h0, c0 = states
    B, T, I = X.shape
    H = h0.shape[-1]
    O = params["fc1_w"].shape[0]

    # ---- pack LSTM params: [W_ih^T ; W_hh^T ; b_ih+b_hh], rows padded to x8 ----
    lstm_rows = _ru8(I + H + 1)
    lstm_pack = jnp.zeros((lstm_rows, 4 * H), jnp.float32)
    lstm_pack = (lstm_pack
                 .at[0:I].set(params["w_ih"].T)
                 .at[I:I + H].set(params["w_hh"].T)
                 .at[I + H:I + H + 1].set((params["b_ih"] + params["b_hh"])[None, :]))

    # ---- pack FC params: [fc1_w^T ; fc1_b ; fc2_w^T ; fc2_b], 8-aligned rows ----
    r_fc1b = H
    r_fc2w = _ru8(H + 1)
    r_fc2b = _ru8(r_fc2w + O)
    fc_rows = _ru8(r_fc2b + 1)
    fc_pack = jnp.zeros((fc_rows, O), jnp.float32)
    fc_pack = (fc_pack
               .at[0:H].set(params["fc1_w"].T)
               .at[r_fc1b:r_fc1b + 1].set(params["fc1_b"][None, :])
               .at[r_fc2w:r_fc2w + O].set(params["fc2_w"].T)
               .at[r_fc2b:r_fc2b + 1].set(params["fc2_b"][None, :]))

    hc0 = jnp.concatenate([h0, c0], axis=0)    # (2, B, H)

    vmem = pl.BlockSpec(memory_space=pltpu.MemorySpace.VMEM)
    out_flat, hc = pl.pallas_call(
        _lstm_fc_kernel,
        out_shape=(
            jax.ShapeDtypeStruct((B * T, O), jnp.float32),
            jax.ShapeDtypeStruct((2, B, H), jnp.float32),
        ),
        in_specs=[vmem, vmem, vmem, vmem],
        out_specs=(vmem, vmem),
    )(X, hc0, lstm_pack, fc_pack)

    out = out_flat.reshape(B, T, O)            # row-major reshape: free
    return out, (hc[0:1], hc[1:2])


def reference_forward(X, states, params):
    """Pure-JAX reference mirroring torch semantics (sanity check)."""
    h, c = states[0][0], states[1][0]
    H = h.shape[-1]
    w_ih, w_hh = params["w_ih"], params["w_hh"]
    b = params["b_ih"] + params["b_hh"]

    def step(carry, x_t):
        h, c = carry
        gates = x_t @ w_ih.T + h @ w_hh.T + b
        i = jax.nn.sigmoid(gates[:, 0 * H:1 * H])
        f = jax.nn.sigmoid(gates[:, 1 * H:2 * H])
        g = jnp.tanh(gates[:, 2 * H:3 * H])
        o = jax.nn.sigmoid(gates[:, 3 * H:4 * H])
        c = f * c + i * g
        h = o * jnp.tanh(c)
        return (h, c), h

    (hT, cT), hs = jax.lax.scan(step, (h, c), jnp.transpose(X, (1, 0, 2)))
    hs = jnp.transpose(hs, (1, 0, 2))
    y = jnp.maximum(hs @ params["fc1_w"].T + params["fc1_b"], 0.0)
    y = y @ params["fc2_w"].T + params["fc2_b"]
    return y, (hT[None], cT[None])


if __name__ == "__main__":
    # Small shapes consistent with the module's forward (batch_first LSTM + 2 FCs).
    B, T, I, H, O = 2, 8, 16, 32, 16
    num_layers = 1

    key = jax.random.PRNGKey(0)
    ks = jax.random.split(key, 12)
    s = 1.0 / np.sqrt(H)  # PyTorch-style uniform init scale

    params = {
        "w_ih": jax.random.uniform(ks[0], (4 * H, I), jnp.float32, -s, s),
        "w_hh": jax.random.uniform(ks[1], (4 * H, H), jnp.float32, -s, s),
        "b_ih": jax.random.uniform(ks[2], (4 * H,), jnp.float32, -s, s),
        "b_hh": jax.random.uniform(ks[3], (4 * H,), jnp.float32, -s, s),
        "fc1_w": jax.random.uniform(ks[4], (O, H), jnp.float32, -s, s),
        "fc1_b": jax.random.uniform(ks[5], (O,), jnp.float32, -s, s),
        "fc2_w": jax.random.uniform(ks[6], (O, O), jnp.float32, -1.0 / np.sqrt(O), 1.0 / np.sqrt(O)),
        "fc2_b": jax.random.uniform(ks[7], (O,), jnp.float32, -1.0 / np.sqrt(O), 1.0 / np.sqrt(O)),
    }

    X = jax.random.normal(ks[8], (B, T, I), jnp.float32)
    h0 = jax.random.normal(ks[9], (num_layers, B, H), jnp.float32)
    c0 = jax.random.normal(ks[10], (num_layers, B, H), jnp.float32)

    out, (hT, cT) = model_forward(X, (h0, c0), params)
    jax.block_until_ready((out, hT, cT))

    out_r, (hT_r, cT_r) = reference_forward(X, (h0, c0), params)
    np.testing.assert_allclose(np.asarray(out), np.asarray(out_r), rtol=1e-4, atol=1e-4)
    np.testing.assert_allclose(np.asarray(hT), np.asarray(hT_r), rtol=1e-4, atol=1e-4)
    np.testing.assert_allclose(np.asarray(cT), np.asarray(cT_r), rtol=1e-4, atol=1e-4)

    print("KERNEL_OK")
</pallas_src>

<mosaic_0001>
module attributes {stable_mosaic.version = 11 : i64} {
  func.func @_lstm_fc_kernel(%arg0: memref<2x8x16xf32, #tpu.memory_space<vmem>>, %arg1: memref<2x2x32xf32, #tpu.memory_space<vmem>>, %arg2: memref<56x128xf32, #tpu.memory_space<vmem>>, %arg3: memref<64x16xf32, #tpu.memory_space<vmem>>, %arg4: memref<16x16xf32, #tpu.memory_space<vmem>>, %arg5: memref<2x2x32xf32, #tpu.memory_space<vmem>>) attributes {dimension_semantics = [], scalar_prefetch = 0 : i64, scratch_operands = 0 : i64, tpu.core_type = #tpu.core_type<tc>} {
    %c0 = arith.constant 0 : index
    %c0_0 = arith.constant 0 : index
    %0 = vector.load %arg2[%c0, %c0_0] : memref<56x128xf32, #tpu.memory_space<vmem>>, vector<16x128xf32>
    %c16 = arith.constant 16 : index
    %c0_1 = arith.constant 0 : index
    %1 = vector.load %arg2[%c16, %c0_1] : memref<56x128xf32, #tpu.memory_space<vmem>>, vector<32x128xf32>
    %c48 = arith.constant 48 : index
    %c0_2 = arith.constant 0 : index
    %2 = vector.load %arg2[%c48, %c0_2] : memref<56x128xf32, #tpu.memory_space<vmem>>, vector<1x128xf32>
    %c0_3 = arith.constant 0 : index
    %c0_4 = arith.constant 0 : index
    %c0_5 = arith.constant 0 : index
    %3 = vector.load %arg0[%c0_3, %c0_4, %c0_5] : memref<2x8x16xf32, #tpu.memory_space<vmem>>, vector<2x8x16xf32>
    %4 = vector.shape_cast %3 : vector<2x8x16xf32> to vector<16x16xf32>
    %cst = arith.constant dense<0.000000e+00> : vector<16x128xf32>
    %5 = tpu.matmul %4, %0, %cst {dimension_numbers = #tpu.dot_dimension_numbers<[1], [0], [0], [1], [0, 0, 1, 1], [], []>} : vector<16x16xf32>, vector<16x128xf32>, vector<16x128xf32> -> vector<16x128xf32>
    %6 = vector.broadcast %2 : vector<1x128xf32> to vector<16x128xf32>
    %7 = arith.addf %5, %6 : vector<16x128xf32>
    %8 = tpu.iota {dimensions = array<i32: 1>} : vector<1x128xi32>
    %c64_i32 = arith.constant 64 : i32
    %9 = vector.broadcast %c64_i32 : i32 to vector<1x128xi32>
    %10 = arith.cmpi sge, %8, %9 : vector<1x128xi32>
    %c96_i32 = arith.constant 96 : i32
    %11 = vector.broadcast %c96_i32 : i32 to vector<1x128xi32>
    %12 = arith.cmpi slt, %8, %11 : vector<1x128xi32>
    %13 = arith.andi %10, %12 : vector<1x128xi1>
    %cst_6 = arith.constant 1.000000e+00 : f32
    %cst_7 = arith.constant 5.000000e-01 : f32
    %14 = vector.broadcast %cst_6 : f32 to vector<1x128xf32>
    %15 = vector.broadcast %cst_7 : f32 to vector<1x128xf32>
    %16 = arith.select %13, %14, %15 : vector<1x128xi1>, vector<1x128xf32>
    %cst_8 = arith.constant 1.000000e+00 : f32
    %cst_9 = arith.constant 5.000000e-01 : f32
    %17 = vector.broadcast %cst_8 : f32 to vector<1x128xf32>
    %18 = vector.broadcast %cst_9 : f32 to vector<1x128xf32>
    %19 = arith.select %13, %17, %18 : vector<1x128xi1>, vector<1x128xf32>
    %cst_10 = arith.constant 0.000000e+00 : f32
    %cst_11 = arith.constant 5.000000e-01 : f32
    %20 = vector.broadcast %cst_10 : f32 to vector<1x128xf32>
    %21 = vector.broadcast %cst_11 : f32 to vector<1x128xf32>
    %22 = arith.select %13, %20, %21 : vector<1x128xi1>, vector<1x128xf32>
    %c0_12 = arith.constant 0 : index
    %c0_13 = arith.constant 0 : index
    %c0_14 = arith.constant 0 : index
    %23 = vector.load %arg1[%c0_12, %c0_13, %c0_14] : memref<2x2x32xf32, #tpu.memory_space<vmem>>, vector<1x2x32xf32>
    %24 = vector.shape_cast %23 : vector<1x2x32xf32> to vector<2x32xf32>
    %c1 = arith.constant 1 : index
    %c0_15 = arith.constant 0 : index
    %c0_16 = arith.constant 0 : index
    %25 = vector.load %arg1[%c1, %c0_15, %c0_16] : memref<2x2x32xf32, #tpu.memory_space<vmem>>, vector<1x2x32xf32>
    %26 = vector.shape_cast %25 : vector<1x2x32xf32> to vector<2x32xf32>
    %27 = vector.extract_strided_slice %7 {offsets = [0, 0], sizes = [1, 128], strides = [1, 1]} : vector<16x128xf32> to vector<1x128xf32>
    %28 = vector.extract_strided_slice %7 {offsets = [8, 0], sizes = [1, 128], strides = [1, 1]} : vector<16x128xf32> to vector<1x128xf32>
    %29 = tpu.concatenate %27, %28 in 0 : vector<1x128xf32>, vector<1x128xf32> -> vector<2x128xf32>
    %cst_17 = arith.constant dense<0.000000e+00> : vector<2x128xf32>
    %30 = tpu.matmul %24, %1, %cst_17 {dimension_numbers = #tpu.dot_dimension_numbers<[1], [0], [0], [1], [0, 0, 1, 1], [], []>} : vector<2x32xf32>, vector<32x128xf32>, vector<2x128xf32> -> vector<2x128xf32>
    %31 = arith.addf %29, %30 : vector<2x128xf32>
    %32 = vector.broadcast %16 : vector<1x128xf32> to vector<2x128xf32>
    %33 = arith.mulf %31, %32 : vector<2x128xf32>
    %34 = math.tanh %33 : vector<2x128xf32>
    %35 = vector.broadcast %19 : vector<1x128xf32> to vector<2x128xf32>
    %36 = arith.mulf %35, %34 : vector<2x128xf32>
    %37 = vector.broadcast %22 : vector<1x128xf32> to vector<2x128xf32>
    %38 = arith.addf %37, %36 : vector<2x128xf32>
    %39 = vector.extract_strided_slice %38 {offsets = [0, 0], sizes = [2, 32], strides = [1, 1]} : vector<2x128xf32> to vector<2x32xf32>
    %40 = vector.extract_strided_slice %38 {offsets = [0, 32], sizes = [2, 32], strides = [1, 1]} : vector<2x128xf32> to vector<2x32xf32>
    %41 = vector.extract_strided_slice %38 {offsets = [0, 64], sizes = [2, 32], strides = [1, 1]} : vector<2x128xf32> to vector<2x32xf32>
    %42 = vector.extract_strided_slice %38 {offsets = [0, 96], sizes = [2, 32], strides = [1, 1]} : vector<2x128xf32> to vector<2x32xf32>
    %43 = arith.mulf %40, %26 : vector<2x32xf32>
    %44 = arith.mulf %39, %41 : vector<2x32xf32>
    %45 = arith.addf %43, %44 : vector<2x32xf32>
    %46 = math.tanh %45 : vector<2x32xf32>
    %47 = arith.mulf %42, %46 : vector<2x32xf32>
    %48 = vector.extract_strided_slice %7 {offsets = [1, 0], sizes = [1, 128], strides = [1, 1]} : vector<16x128xf32> to vector<1x128xf32>
    %49 = vector.extract_strided_slice %7 {offsets = [9, 0], sizes = [1, 128], strides = [1, 1]} : vector<16x128xf32> to vector<1x128xf32>
    %50 = tpu.concatenate %48, %49 in 0 : vector<1x128xf32>, vector<1x128xf32> -> vector<2x128xf32>
    %cst_18 = arith.constant dense<0.000000e+00> : vector<2x128xf32>
    %51 = tpu.matmul %47, %1, %cst_18 {dimension_numbers = #tpu.dot_dimension_numbers<[1], [0], [0], [1], [0, 0, 1, 1], [], []>} : vector<2x32xf32>, vector<32x128xf32>, vector<2x128xf32> -> vector<2x128xf32>
    %52 = arith.addf %50, %51 : vector<2x128xf32>
    %53 = vector.broadcast %16 : vector<1x128xf32> to vector<2x128xf32>
    %54 = arith.mulf %52, %53 : vector<2x128xf32>
    %55 = math.tanh %54 : vector<2x128xf32>
    %56 = vector.broadcast %19 : vector<1x128xf32> to vector<2x128xf32>
    %57 = arith.mulf %56, %55 : vector<2x128xf32>
    %58 = vector.broadcast %22 : vector<1x128xf32> to vector<2x128xf32>
    %59 = arith.addf %58, %57 : vector<2x128xf32>
    %60 = vector.extract_strided_slice %59 {offsets = [0, 0], sizes = [2, 32], strides = [1, 1]} : vector<2x128xf32> to vector<2x32xf32>
    %61 = vector.extract_strided_slice %59 {offsets = [0, 32], sizes = [2, 32], strides = [1, 1]} : vector<2x128xf32> to vector<2x32xf32>
    %62 = vector.extract_strided_slice %59 {offsets = [0, 64], sizes = [2, 32], strides = [1, 1]} : vector<2x128xf32> to vector<2x32xf32>
    %63 = vector.extract_strided_slice %59 {offsets = [0, 96], sizes = [2, 32], strides = [1, 1]} : vector<2x128xf32> to vector<2x32xf32>
    %64 = arith.mulf %61, %45 : vector<2x32xf32>
    %65 = arith.mulf %60, %62 : vector<2x32xf32>
    %66 = arith.addf %64, %65 : vector<2x32xf32>
    %67 = math.tanh %66 : vector<2x32xf32>
    %68 = arith.mulf %63, %67 : vector<2x32xf32>
    %69 = vector.extract_strided_slice %7 {offsets = [2, 0], sizes = [1, 128], strides = [1, 1]} : vector<16x128xf32> to vector<1x128xf32>
    %70 = vector.extract_strided_slice %7 {offsets = [10, 0], sizes = [1, 128], strides = [1, 1]} : vector<16x128xf32> to vector<1x128xf32>
    %71 = tpu.concatenate %69, %70 in 0 : vector<1x128xf32>, vector<1x128xf32> -> vector<2x128xf32>
    %cst_19 = arith.constant dense<0.000000e+00> : vector<2x128xf32>
    %72 = tpu.matmul %68, %1, %cst_19 {dimension_numbers = #tpu.dot_dimension_numbers<[1], [0], [0], [1], [0, 0, 1, 1], [], []>} : vector<2x32xf32>, vector<32x128xf32>, vector<2x128xf32> -> vector<2x128xf32>
    %73 = arith.addf %71, %72 : vector<2x128xf32>
    %74 = vector.broadcast %16 : vector<1x128xf32> to vector<2x128xf32>
    %75 = arith.mulf %73, %74 : vector<2x128xf32>
    %76 = math.tanh %75 : vector<2x128xf32>
    %77 = vector.broadcast %19 : vector<1x128xf32> to vector<2x128xf32>
    %78 = arith.mulf %77, %76 : vector<2x128xf32>
    %79 = vector.broadcast %22 : vector<1x128xf32> to vector<2x128xf32>
    %80 = arith.addf %79, %78 : vector<2x128xf32>
    %81 = vector.extract_strided_slice %80 {offsets = [0, 0], sizes = [2, 32], strides = [1, 1]} : vector<2x128xf32> to vector<2x32xf32>
    %82 = vector.extract_strided_slice %80 {offsets = [0, 32], sizes = [2, 32], strides = [1, 1]} : vector<2x128xf32> to vector<2x32xf32>
    %83 = vector.extract_strided_slice %80 {offsets = [0, 64], sizes = [2, 32], strides = [1, 1]} : vector<2x128xf32> to vector<2x32xf32>
    %84 = vector.extract_strided_slice %80 {offsets = [0, 96], sizes = [2, 32], strides = [1, 1]} : vector<2x128xf32> to vector<2x32xf32>
    %85 = arith.mulf %82, %66 : vector<2x32xf32>
    %86 = arith.mulf %81, %83 : vector<2x32xf32>
    %87 = arith.addf %85, %86 : vector<2x32xf32>
    %88 = math.tanh %87 : vector<2x32xf32>
    %89 = arith.mulf %84, %88 : vector<2x32xf32>
    %90 = vector.extract_strided_slice %7 {offsets = [3, 0], sizes = [1, 128], strides = [1, 1]} : vector<16x128xf32> to vector<1x128xf32>
    %91 = vector.extract_strided_slice %7 {offsets = [11, 0], sizes = [1, 128], strides = [1, 1]} : vector<16x128xf32> to vector<1x128xf32>
    %92 = tpu.concatenate %90, %91 in 0 : vector<1x128xf32>, vector<1x128xf32> -> vector<2x128xf32>
    %cst_20 = arith.constant dense<0.000000e+00> : vector<2x128xf32>
    %93 = tpu.matmul %89, %1, %cst_20 {dimension_numbers = #tpu.dot_dimension_numbers<[1], [0], [0], [1], [0, 0, 1, 1], [], []>} : vector<2x32xf32>, vector<32x128xf32>, vector<2x128xf32> -> vector<2x128xf32>
    %94 = arith.addf %92, %93 : vector<2x128xf32>
    %95 = vector.broadcast %16 : vector<1x128xf32> to vector<2x128xf32>
    %96 = arith.mulf %94, %95 : vector<2x128xf32>
    %97 = math.tanh %96 : vector<2x128xf32>
    %98 = vector.broadcast %19 : vector<1x128xf32> to vector<2x128xf32>
    %99 = arith.mulf %98, %97 : vector<2x128xf32>
    %100 = vector.broadcast %22 : vector<1x128xf32> to vector<2x128xf32>
    %101 = arith.addf %100, %99 : vector<2x128xf32>
    %102 = vector.extract_strided_slice %101 {offsets = [0, 0], sizes = [2, 32], strides = [1, 1]} : vector<2x128xf32> to vector<2x32xf32>
    %103 = vector.extract_strided_slice %101 {offsets = [0, 32], sizes = [2, 32], strides = [1, 1]} : vector<2x128xf32> to vector<2x32xf32>
    %104 = vector.extract_strided_slice %101 {offsets = [0, 64], sizes = [2, 32], strides = [1, 1]} : vector<2x128xf32> to vector<2x32xf32>
    %105 = vector.extract_strided_slice %101 {offsets = [0, 96], sizes = [2, 32], strides = [1, 1]} : vector<2x128xf32> to vector<2x32xf32>
    %106 = arith.mulf %103, %87 : vector<2x32xf32>
    %107 = arith.mulf %102, %104 : vector<2x32xf32>
    %108 = arith.addf %106, %107 : vector<2x32xf32>
    %109 = math.tanh %108 : vector<2x32xf32>
    %110 = arith.mulf %105, %109 : vector<2x32xf32>
    %111 = vector.extract_strided_slice %7 {offsets = [4, 0], sizes = [1, 128], strides = [1, 1]} : vector<16x128xf32> to vector<1x128xf32>
    %112 = vector.extract_strided_slice %7 {offsets = [12, 0], sizes = [1, 128], strides = [1, 1]} : vector<16x128xf32> to vector<1x128xf32>
    %113 = tpu.concatenate %111, %112 in 0 : vector<1x128xf32>, vector<1x128xf32> -> vector<2x128xf32>
    %cst_21 = arith.constant dense<0.000000e+00> : vector<2x128xf32>
    %114 = tpu.matmul %110, %1, %cst_21 {dimension_numbers = #tpu.dot_dimension_numbers<[1], [0], [0], [1], [0, 0, 1, 1], [], []>} : vector<2x32xf32>, vector<32x128xf32>, vector<2x128xf32> -> vector<2x128xf32>
    %115 = arith.addf %113, %114 : vector<2x128xf32>
    %116 = vector.broadcast %16 : vector<1x128xf32> to vector<2x128xf32>
    %117 = arith.mulf %115, %116 : vector<2x128xf32>
    %118 = math.tanh %117 : vector<2x128xf32>
    %119 = vector.broadcast %19 : vector<1x128xf32> to vector<2x128xf32>
    %120 = arith.mulf %119, %118 : vector<2x128xf32>
    %121 = vector.broadcast %22 : vector<1x128xf32> to vector<2x128xf32>
    %122 = arith.addf %121, %120 : vector<2x128xf32>
    %123 = vector.extract_strided_slice %122 {offsets = [0, 0], sizes = [2, 32], strides = [1, 1]} : vector<2x128xf32> to vector<2x32xf32>
    %124 = vector.extract_strided_slice %122 {offsets = [0, 32], sizes = [2, 32], strides = [1, 1]} : vector<2x128xf32> to vector<2x32xf32>
    %125 = vector.extract_strided_slice %122 {offsets = [0, 64], sizes = [2, 32], strides = [1, 1]} : vector<2x128xf32> to vector<2x32xf32>
    %126 = vector.extract_strided_slice %122 {offsets = [0, 96], sizes = [2, 32], strides = [1, 1]} : vector<2x128xf32> to vector<2x32xf32>
    %127 = arith.mulf %124, %108 : vector<2x32xf32>
    %128 = arith.mulf %123, %125 : vector<2x32xf32>
    %129 = arith.addf %127, %128 : vector<2x32xf32>
    %130 = math.tanh %129 : vector<2x32xf32>
    %131 = arith.mulf %126, %130 : vector<2x32xf32>
    %132 = vector.extract_strided_slice %7 {offsets = [5, 0], sizes = [1, 128], strides = [1, 1]} : vector<16x128xf32> to vector<1x128xf32>
    %133 = vector.extract_strided_slice %7 {offsets = [13, 0], sizes = [1, 128], strides = [1, 1]} : vector<16x128xf32> to vector<1x128xf32>
    %134 = tpu.concatenate %132, %133 in 0 : vector<1x128xf32>, vector<1x128xf32> -> vector<2x128xf32>
    %cst_22 = arith.constant dense<0.000000e+00> : vector<2x128xf32>
    %135 = tpu.matmul %131, %1, %cst_22 {dimension_numbers = #tpu.dot_dimension_numbers<[1], [0], [0], [1], [0, 0, 1, 1], [], []>} : vector<2x32xf32>, vector<32x128xf32>, vector<2x128xf32> -> vector<2x128xf32>
    %136 = arith.addf %134, %135 : vector<2x128xf32>
    %137 = vector.broadcast %16 : vector<1x128xf32> to vector<2x128xf32>
    %138 = arith.mulf %136, %137 : vector<2x128xf32>
    %139 = math.tanh %138 : vector<2x128xf32>
    %140 = vector.broadcast %19 : vector<1x128xf32> to vector<2x128xf32>
    %141 = arith.mulf %140, %139 : vector<2x128xf32>
    %142 = vector.broadcast %22 : vector<1x128xf32> to vector<2x128xf32>
    %143 = arith.addf %142, %141 : vector<2x128xf32>
    %144 = vector.extract_strided_slice %143 {offsets = [0, 0], sizes = [2, 32], strides = [1, 1]} : vector<2x128xf32> to vector<2x32xf32>
    %145 = vector.extract_strided_slice %143 {offsets = [0, 32], sizes = [2, 32], strides = [1, 1]} : vector<2x128xf32> to vector<2x32xf32>
    %146 = vector.extract_strided_slice %143 {offsets = [0, 64], sizes = [2, 32], strides = [1, 1]} : vector<2x128xf32> to vector<2x32xf32>
    %147 = vector.extract_strided_slice %143 {offsets = [0, 96], sizes = [2, 32], strides = [1, 1]} : vector<2x128xf32> to vector<2x32xf32>
    %148 = arith.mulf %145, %129 : vector<2x32xf32>
    %149 = arith.mulf %144, %146 : vector<2x32xf32>
    %150 = arith.addf %148, %149 : vector<2x32xf32>
    %151 = math.tanh %150 : vector<2x32xf32>
    %152 = arith.mulf %147, %151 : vector<2x32xf32>
    %153 = vector.extract_strided_slice %7 {offsets = [6, 0], sizes = [1, 128], strides = [1, 1]} : vector<16x128xf32> to vector<1x128xf32>
    %154 = vector.extract_strided_slice %7 {offsets = [14, 0], sizes = [1, 128], strides = [1, 1]} : vector<16x128xf32> to vector<1x128xf32>
    %155 = tpu.concatenate %153, %154 in 0 : vector<1x128xf32>, vector<1x128xf32> -> vector<2x128xf32>
    %cst_23 = arith.constant dense<0.000000e+00> : vector<2x128xf32>
    %156 = tpu.matmul %152, %1, %cst_23 {dimension_numbers = #tpu.dot_dimension_numbers<[1], [0], [0], [1], [0, 0, 1, 1], [], []>} : vector<2x32xf32>, vector<32x128xf32>, vector<2x128xf32> -> vector<2x128xf32>
    %157 = arith.addf %155, %156 : vector<2x128xf32>
    %158 = vector.broadcast %16 : vector<1x128xf32> to vector<2x128xf32>
    %159 = arith.mulf %157, %158 : vector<2x128xf32>
    %160 = math.tanh %159 : vector<2x128xf32>
    %161 = vector.broadcast %19 : vector<1x128xf32> to vector<2x128xf32>
    %162 = arith.mulf %161, %160 : vector<2x128xf32>
    %163 = vector.broadcast %22 : vector<1x128xf32> to vector<2x128xf32>
    %164 = arith.addf %163, %162 : vector<2x128xf32>
    %165 = vector.extract_strided_slice %164 {offsets = [0, 0], sizes = [2, 32], strides = [1, 1]} : vector<2x128xf32> to vector<2x32xf32>
    %166 = vector.extract_strided_slice %164 {offsets = [0, 32], sizes = [2, 32], strides = [1, 1]} : vector<2x128xf32> to vector<2x32xf32>
    %167 = vector.extract_strided_slice %164 {offsets = [0, 64], sizes = [2, 32], strides = [1, 1]} : vector<2x128xf32> to vector<2x32xf32>
    %168 = vector.extract_strided_slice %164 {offsets = [0, 96], sizes = [2, 32], strides = [1, 1]} : vector<2x128xf32> to vector<2x32xf32>
    %169 = arith.mulf %166, %150 : vector<2x32xf32>
    %170 = arith.mulf %165, %167 : vector<2x32xf32>
    %171 = arith.addf %169, %170 : vector<2x32xf32>
    %172 = math.tanh %171 : vector<2x32xf32>
    %173 = arith.mulf %168, %172 : vector<2x32xf32>
    %174 = vector.extract_strided_slice %7 {offsets = [7, 0], sizes = [1, 128], strides = [1, 1]} : vector<16x128xf32> to vector<1x128xf32>
    %175 = vector.extract_strided_slice %7 {offsets = [15, 0], sizes = [1, 128], strides = [1, 1]} : vector<16x128xf32> to vector<1x128xf32>
    %176 = tpu.concatenate %174, %175 in 0 : vector<1x128xf32>, vector<1x128xf32> -> vector<2x128xf32>
    %cst_24 = arith.constant dense<0.000000e+00> : vector<2x128xf32>
    %177 = tpu.matmul %173, %1, %cst_24 {dimension_numbers = #tpu.dot_dimension_numbers<[1], [0], [0], [1], [0, 0, 1, 1], [], []>} : vector<2x32xf32>, vector<32x128xf32>, vector<2x128xf32> -> vector<2x128xf32>
    %178 = arith.addf %176, %177 : vector<2x128xf32>
    %179 = vector.broadcast %16 : vector<1x128xf32> to vector<2x128xf32>
    %180 = arith.mulf %178, %179 : vector<2x128xf32>
    %181 = math.tanh %180 : vector<2x128xf32>
    %182 = vector.broadcast %19 : vector<1x128xf32> to vector<2x128xf32>
    %183 = arith.mulf %182, %181 : vector<2x128xf32>
    %184 = vector.broadcast %22 : vector<1x128xf32> to vector<2x128xf32>
    %185 = arith.addf %184, %183 : vector<2x128xf32>
    %186 = vector.extract_strided_slice %185 {offsets = [0, 0], sizes = [2, 32], strides = [1, 1]} : vector<2x128xf32> to vector<2x32xf32>
    %187 = vector.extract_strided_slice %185 {offsets = [0, 32], sizes = [2, 32], strides = [1, 1]} : vector<2x128xf32> to vector<2x32xf32>
    %188 = vector.extract_strided_slice %185 {offsets = [0, 64], sizes = [2, 32], strides = [1, 1]} : vector<2x128xf32> to vector<2x32xf32>
    %189 = vector.extract_strided_slice %185 {offsets = [0, 96], sizes = [2, 32], strides = [1, 1]} : vector<2x128xf32> to vector<2x32xf32>
    %190 = arith.mulf %187, %171 : vector<2x32xf32>
    %191 = arith.mulf %186, %188 : vector<2x32xf32>
    %192 = arith.addf %190, %191 : vector<2x32xf32>
    %193 = math.tanh %192 : vector<2x32xf32>
    %194 = arith.mulf %189, %193 : vector<2x32xf32>
    %c0_25 = arith.constant 0 : index
    %c0_26 = arith.constant 0 : index
    %c0_27 = arith.constant 0 : index
    %195 = vector.load %arg5[%c0_25, %c0_26, %c0_27] : memref<2x2x32xf32, #tpu.memory_space<vmem>>, vector<1x2x32xf32>
    %196 = vector.shape_cast %195 : vector<1x2x32xf32> to vector<2x32xf32>
    %197 = vector.shape_cast %194 : vector<2x32xf32> to vector<1x2x32xf32>
    tpu.vector_store %arg5[%c0_25, %c0_26, %c0_27], %197 {strides = array<i32>} : memref<2x2x32xf32, #tpu.memory_space<vmem>>, vector<1x2x32xf32>,
    %c1_28 = arith.constant 1 : index
    %c0_29 = arith.constant 0 : index
    %c0_30 = arith.constant 0 : index
    %198 = vector.load %arg5[%c1_28, %c0_29, %c0_30] : memref<2x2x32xf32, #tpu.memory_space<vmem>>, vector<1x2x32xf32>
    %199 = vector.shape_cast %198 : vector<1x2x32xf32> to vector<2x32xf32>
    %200 = vector.shape_cast %192 : vector<2x32xf32> to vector<1x2x32xf32>
    tpu.vector_store %arg5[%c1_28, %c0_29, %c0_30], %200 {strides = array<i32>} : memref<2x2x32xf32, #tpu.memory_space<vmem>>, vector<1x2x32xf32>,
    %201 = vector.extract_strided_slice %47 {offsets = [0, 0], sizes = [1, 32], strides = [1, 1]} : vector<2x32xf32> to vector<1x32xf32>
    %202 = vector.extract_strided_slice %68 {offsets = [0, 0], sizes = [1, 32], strides = [1, 1]} : vector<2x32xf32> to vector<1x32xf32>
    %203 = vector.extract_strided_slice %89 {offsets = [0, 0], sizes = [1, 32], strides = [1, 1]} : vector<2x32xf32> to vector<1x32xf32>
    %204 = vector.extract_strided_slice %110 {offsets = [0, 0], sizes = [1, 32], strides = [1, 1]} : vector<2x32xf32> to vector<1x32xf32>
    %205 = vector.extract_strided_slice %131 {offsets = [0, 0], sizes = [1, 32], strides = [1, 1]} : vector<2x32xf32> to vector<1x32xf32>
    %206 = vector.extract_strided_slice %152 {offsets = [0, 0], sizes = [1, 32], strides = [1, 1]} : vector<2x32xf32> to vector<1x32xf32>
    %207 = vector.extract_strided_slice %173 {offsets = [0, 0], sizes = [1, 32], strides = [1, 1]} : vector<2x32xf32> to vector<1x32xf32>
    %208 = vector.extract_strided_slice %194 {offsets = [0, 0], sizes = [1, 32], strides = [1, 1]} : vector<2x32xf32> to vector<1x32xf32>
    %209 = tpu.concatenate %201, %202, %203, %204, %205, %206, %207, %208 in 0 : vector<1x32xf32>, vector<1x32xf32>, vector<1x32xf32>, vector<1x32xf32>, vector<1x32xf32>, vector<1x32xf32>, vector<1x32xf32>, vector<1x32xf32> -> vector<8x32xf32>
    %210 = vector.extract_strided_slice %47 {offsets = [1, 0], sizes = [1, 32], strides = [1, 1]} : vector<2x32xf32> to vector<1x32xf32>
    %211 = vector.extract_strided_slice %68 {offsets = [1, 0], sizes = [1, 32], strides = [1, 1]} : vector<2x32xf32> to vector<1x32xf32>
    %212 = vector.extract_strided_slice %89 {offsets = [1, 0], sizes = [1, 32], strides = [1, 1]} : vector<2x32xf32> to vector<1x32xf32>
    %213 = vector.extract_strided_slice %110 {offsets = [1, 0], sizes = [1, 32], strides = [1, 1]} : vector<2x32xf32> to vector<1x32xf32>
    %214 = vector.extract_strided_slice %131 {offsets = [1, 0], sizes = [1, 32], strides = [1, 1]} : vector<2x32xf32> to vector<1x32xf32>
    %215 = vector.extract_strided_slice %152 {offsets = [1, 0], sizes = [1, 32], strides = [1, 1]} : vector<2x32xf32> to vector<1x32xf32>
    %216 = vector.extract_strided_slice %173 {offsets = [1, 0], sizes = [1, 32], strides = [1, 1]} : vector<2x32xf32> to vector<1x32xf32>
    %217 = vector.extract_strided_slice %194 {offsets = [1, 0], sizes = [1, 32], strides = [1, 1]} : vector<2x32xf32> to vector<1x32xf32>
    %218 = tpu.concatenate %210, %211, %212, %213, %214, %215, %216, %217 in 0 : vector<1x32xf32>, vector<1x32xf32>, vector<1x32xf32>, vector<1x32xf32>, vector<1x32xf32>, vector<1x32xf32>, vector<1x32xf32>, vector<1x32xf32> -> vector<8x32xf32>
    %219 = tpu.concatenate %209, %218 in 0 : vector<8x32xf32>, vector<8x32xf32> -> vector<16x32xf32>
    %c0_31 = arith.constant 0 : index
    %c0_32 = arith.constant 0 : index
    %220 = vector.load %arg3[%c0_31, %c0_32] : memref<64x16xf32, #tpu.memory_space<vmem>>, vector<32x16xf32>
    %c32 = arith.constant 32 : index
    %c0_33 = arith.constant 0 : index
    %221 = vector.load %arg3[%c32, %c0_33] : memref<64x16xf32, #tpu.memory_space<vmem>>, vector<1x16xf32>
    %c40 = arith.constant 40 : index
    %c0_34 = arith.constant 0 : index
    %222 = vector.load %arg3[%c40, %c0_34] : memref<64x16xf32, #tpu.memory_space<vmem>>, vector<16x16xf32>
    %c56 = arith.constant 56 : index
    %c0_35 = arith.constant 0 : index
    %223 = vector.load %arg3[%c56, %c0_35] : memref<64x16xf32, #tpu.memory_space<vmem>>, vector<1x16xf32>
    %cst_36 = arith.constant dense<0.000000e+00> : vector<16x16xf32>
    %224 = tpu.matmul %219, %220, %cst_36 {dimension_numbers = #tpu.dot_dimension_numbers<[1], [0], [0], [1], [0, 0, 1, 1], [], []>} : vector<16x32xf32>, vector<32x16xf32>, vector<16x16xf32> -> vector<16x16xf32>
    %225 = vector.broadcast %221 : vector<1x16xf32> to vector<16x16xf32>
    %226 = arith.addf %224, %225 : vector<16x16xf32>
    %cst_37 = arith.constant 0.000000e+00 : f32
    %227 = vector.broadcast %cst_37 : f32 to vector<16x16xf32>
    %228 = arith.maximumf %226, %227 : vector<16x16xf32>
    %cst_38 = arith.constant dense<0.000000e+00> : vector<16x16xf32>
    %229 = tpu.matmul %228, %222, %cst_38 {dimension_numbers = #tpu.dot_dimension_numbers<[1], [0], [0], [1], [0, 0, 1, 1], [], []>} : vector<16x16xf32>, vector<16x16xf32>, vector<16x16xf32> -> vector<16x16xf32>
    %230 = vector.broadcast %223 : vector<1x16xf32> to vector<16x16xf32>
    %231 = arith.addf %229, %230 : vector<16x16xf32>
    %c0_39 = arith.constant 0 : index
    %c0_40 = arith.constant 0 : index
    %232 = vector.load %arg4[%c0_39, %c0_40] : memref<16x16xf32, #tpu.memory_space<vmem>>, vector<16x16xf32>
    tpu.vector_store %arg4[%c0_39, %c0_40], %231 {strides = array<i32>} : memref<16x16xf32, #tpu.memory_space<vmem>>, vector<16x16xf32>,
    return
  }
}

</mosaic_0001>

<llo_original>
// kernel: model_forward.1
$region0: #{model_forward.1}
  #allocation0 [shape = 'u32[]', space=smem, size = 0x4, offset = 0x4, fixed_abs, tag = 'smem constant byte address 0x4 - core index']
  #allocation1 [shape = 'u32[144,128]{1,0:T(1,128)}', space=vmem, size = 0x12000, scoped, tag = 'internal scratch']
  %s0 = inlined_call_operand.vmem [shape: f32[2,8,16], index: 0, kind: input, shape index: {}]
  %s1 = inlined_call_operand.vmem [shape: f32[2,2,32], index: 1, kind: input, shape index: {}]
  %s2 = inlined_call_operand.vmem [shape: f32[56,128], index: 2, kind: input, shape index: {}]
  %s3 = inlined_call_operand.vmem [shape: f32[64,16], index: 3, kind: input, shape index: {}]
  %s4 = inlined_call_operand.hbm [shape: f32[16,16], index: 4, kind: output, shape index: {0}]
  %s5 = inlined_call_operand.vmem [shape: f32[2,2,32], index: 5, kind: output, shape index: {1}]
  %6 = xla_tuple %s4, %s5
  %s7 = sld [smem:[#allocation0]]
  $region34: #{model_forward.1} parent=0
    _
  %s9 = ssub.s32 1, %s7
  %s10 = scalar_select 0, %s9, %s7
  $region1: #{model_forward.1} parent=0
    #allocation2 [shape = 'u8[8192]{0}', space=vmem, size = 0x2000, scoped, tag = 'output window, operand 0, single buffered']
    #allocation3 [shape = 's32[1]{0}', space=sflag, size = 0x4, scoped, tag = 'scoped memory for model_forward.1']
    %11 = vsyncpa [#allocation3], 0
    // Predicated region
    $region2: #{model_forward.1} parent=1 // pred_check
      _
    $region3: #{model_forward.1} parent=1 // pred_check_branch
      %13 = sbr.rel (0) target = $region5
    $region4: #{model_forward.1} parent=1 // pred_region
      _
    $region5: #{model_forward.1} parent=1 // pred_fallthru
      _
    // Predicated region
    $region6: #{model_forward.1} parent=1 // pred_check
      _
    $region7: #{model_forward.1} parent=1 // pred_check_branch
      %15 = sbr.rel (0) target = $region9
    $region8: #{model_forward.1} parent=1 // pred_region
      _
    $region9: #{model_forward.1} parent=1 // pred_fallthru
      _
    // Predicated region
    $region10: #{model_forward.1} parent=1 // pred_check
      _
    $region11: #{model_forward.1} parent=1 // pred_check_branch
      %17 = sbr.rel (0) target = $region13
    $region12: #{model_forward.1} parent=1 // pred_region
      _
    $region13: #{model_forward.1} parent=1 // pred_fallthru
      _
    // Predicated region
    $region14: #{model_forward.1} parent=1 // pred_check
      _
    $region15: #{model_forward.1} parent=1 // pred_check_branch
      %19 = sbr.rel (0) target = $region17
    $region16: #{model_forward.1} parent=1 // pred_region
      _
    $region17: #{model_forward.1} parent=1 // pred_fallthru
      _
    %v20 = vld [vmem:[%s2] sm:$0xff]
    %v21 = vld [vmem:[%s2 + $0x8] sm:$0xff]
    %v22 = vld [vmem:[%s2 + $0x10] sm:$0xff]
    %v23 = vld [vmem:[%s2 + $0x18] sm:$0xff]
    %v24 = vld [vmem:[%s2 + $0x20] sm:$0xff]
    %v25 = vld [vmem:[%s2 + $0x28] sm:$0xff]
    %v26 = vld [vmem:[%s2 + $0x30] sm:$0x1]
    %v27 = vld [vmem:[%s0] sm:$0xff]
    %v28 = vld [vmem:[%s0 + $0x8] sm:$0xff]
    %v29 = vlaneseq
    %v30 = vshrl.u32 %v29, 7
    %v31 = vsub.s32 0, %v30
    %v32 = vrot.slane %v26, %v31
    %vm33 = vcmask 130048
    %v35 = vsel %vm33, %v27, 0
    %v38 = vsel %vm33, %v28, 0
    %40 = vmatprep.subr.mxu0 0.0
    %41 = vmatpush1.msra.mxu0 %v20
    %42 = vmatprep.subr.mxu0 0.0
    %43 = vmatpush1.msra.mxu0 %v21
    %44 = vmatprep.subr.mxu0 0.0
    %45 = vmatpush1.msra.mxu0 0.0
    %46 = vmatprep.subr.mxu0 0.0
    %47 = vmatpush1.msra.mxu0 0.0
    %48 = vmatprep.subr.mxu0 0.0
    %49 = vmatpush1.msra.mxu0 0.0
    %50 = vmatprep.subr.mxu0 0.0
    %51 = vmatpush1.msra.mxu0 0.0
    %52 = vmatprep.subr.mxu0 0.0
    %53 = vmatpush1.msra.mxu0 0.0
    %54 = vmatprep.subr.mxu0 0.0
    %55 = vmatpush1.msra.mxu0 0.0
    %56 = vmatprep.subr.mxu0 0.0
    %57 = vmatpush1.msra.mxu0 0.0
    %58 = vmatprep.subr.mxu0 0.0
    %59 = vmatpush1.msra.mxu0 0.0
    %60 = vmatprep.subr.mxu0 0.0
    %61 = vmatpush1.msra.mxu0 0.0
    %62 = vmatprep.subr.mxu0 0.0
    %63 = vmatpush1.msra.mxu0 0.0
    %64 = vmatprep.subr.mxu0 0.0
    %65 = vmatpush1.msra.mxu0 0.0
    %66 = vmatprep.subr.mxu0 0.0
    %67 = vmatpush1.msra.mxu0 0.0
    %68 = vmatprep.subr.mxu0 0.0
    %69 = vmatpush1.msra.mxu0 0.0
    %70 = vmatprep.subr.mxu0 0.0
    %71 = vmatpush1.msra.mxu0 0.0
    %72 = vmatprep.subr.mxu0 0.0
    %73 = vmatpush1.msra.mxu0 0.0
    %74 = vmatprep.subr.mxu0 0.0
    %75 = vmatpush1.msra.mxu0 0.0
    %76 = vmatprep.subr.mxu0 0.0
    %77 = vmatpush1.msra.mxu0 0.0
    %78 = vmatprep.subr.mxu0 0.0
    %79 = vmatpush1.msra.mxu0 0.0
    %80 = vmatprep.subr.mxu0 0.0
    %81 = vmatpush1.msra.mxu0 0.0
    %82 = vmatprep.subr.mxu0 0.0
    %83 = vmatpush1.msra.mxu0 0.0
    %84 = vmatprep.subr.mxu0 0.0
    %85 = vmatpush1.msra.mxu0 0.0
    %86 = vmatprep.subr.mxu0 0.0
    %87 = vmatpush1.msra.mxu0 0.0
    %88 = vmatprep.subr.mxu0 0.0
    %89 = vmatpush1.msra.mxu0 0.0
    %90 = vmatprep.subr.mxu0 0.0
    %91 = vmatpush1.msra.mxu0 0.0
    %92 = vmatprep.subr.mxu0 0.0
    %93 = vmatpush1.msra.mxu0 0.0
    %94 = vmatprep.subr.mxu0 0.0
    %95 = vmatpush1.msra.mxu0 0.0
    %96 = vmatprep.subr.mxu0 0.0
    %97 = vmatpush1.msra.mxu0 0.0
    %98 = vmatprep.subr.mxu0 0.0
    %99 = vmatpush1.msra.mxu0 0.0
    %100 = vmatprep.subr.mxu0 0.0
    %101 = vmatpush1.msra.mxu0 0.0
    %102 = vmatprep.subr.mxu0 0.0
    %103 = vmatpush1.msra.mxu0 0.0
    %104 = vmatprep.mubr.f32.mxu0 0.0
    %105 = vmatmul.mubr.f32.gmra.mrb[0].mxu0 %v35
    %v106 = vpop.f32.mrb[0].mxu0
    %v107 = vadd.f32 %v32, %v106
    %v108 = vpop.f32.mrb[0].mxu0
    %109 = vmatprep.mubr.f32.mxu0 0.0
    %110 = vmatmul.mubr.f32.gmra.mrb[0].mxu0 %v38
    %v111 = vpop.f32.mrb[0].mxu0
    %v112 = vadd.f32 %v32, %v111
    %v113 = vpop.f32.mrb[0].mxu0
    %114 = vdwg.mxu0
    %v115 = vlaneseq
    %v116 = vand.u32 %v115, 127
    %vm117 = vcmp.ge.s32.totalorder %v116, 64
    %vm118 = vcmp.lt.s32.totalorder %v116, 96
    %vm119 = vmand %vm117, %vm118
    %v120 = vsel %vm119, 1.0, 0.5
    %v121 = vsel %vm119, 0.0, 0.5
    %v122 = vld [vmem:[%s1] sm:$0x3]
    %s123 = scalar_lea.vmem %s1, 2
    %v124 = vld [vmem:[%s123] sm:$0x3]
    %v126 = vrot.slane %v112, 7
    %vm128 = vcmask 1040384
    %v129 = vsel %vm128, %v107, %v126
    %vm130 = vcmask 261120
    %v132 = vsel %vm130, %v122, 0
    %134 = vmatprep.subr.mxu0 0.0
    %135 = vmatpush1.msra.mxu0 %v22
    %136 = vmatprep.subr.mxu0 0.0
    %137 = vmatpush1.msra.mxu0 %v23
    %138 = vmatprep.subr.mxu0 0.0
    %139 = vmatpush1.msra.mxu0 %v24
    %140 = vmatprep.subr.mxu0 0.0
    %141 = vmatpush1.msra.mxu0 %v25
    %142 = vmatprep.subr.mxu0 0.0
    %143 = vmatpush1.msra.mxu0 0.0
    %144 = vmatprep.subr.mxu0 0.0
    %145 = vmatpush1.msra.mxu0 0.0
    %146 = vmatprep.subr.mxu0 0.0
    %147 = vmatpush1.msra.mxu0 0.0
    %148 = vmatprep.subr.mxu0 0.0
    %149 = vmatpush1.msra.mxu0 0.0
    %150 = vmatprep.subr.mxu0 0.0
    %151 = vmatpush1.msra.mxu0 0.0
    %152 = vmatprep.subr.mxu0 0.0
    %153 = vmatpush1.msra.mxu0 0.0
    %154 = vmatprep.subr.mxu0 0.0
    %155 = vmatpush1.msra.mxu0 0.0
    %156 = vmatprep.subr.mxu0 0.0
    %157 = vmatpush1.msra.mxu0 0.0
    %158 = vmatprep.subr.mxu0 0.0
    %159 = vmatpush1.msra.mxu0 0.0
    %160 = vmatprep.subr.mxu0 0.0
    %161 = vmatpush1.msra.mxu0 0.0
    %162 = vmatprep.subr.mxu0 0.0
    %163 = vmatpush1.msra.mxu0 0.0
    %164 = vmatprep.subr.mxu0 0.0
    %165 = vmatpush1.msra.mxu0 0.0
    %166 = vmatprep.subr.mxu0 0.0
    %167 = vmatpush1.msra.mxu0 0.0
    %168 = vmatprep.subr.mxu0 0.0
    %169 = vmatpush1.msra.mxu0 0.0
    %170 = vmatprep.subr.mxu0 0.0
    %171 = vmatpush1.msra.mxu0 0.0
    %172 = vmatprep.subr.mxu0 0.0
    %173 = vmatpush1.msra.mxu0 0.0
    %174 = vmatprep.subr.mxu0 0.0
    %175 = vmatpush1.msra.mxu0 0.0
    %176 = vmatprep.subr.mxu0 0.0
    %177 = vmatpush1.msra.mxu0 0.0
    %178 = vmatprep.subr.mxu0 0.0
    %179 = vmatpush1.msra.mxu0 0.0
    %180 = vmatprep.subr.mxu0 0.0
    %181 = vmatpush1.msra.mxu0 0.0
    %182 = vmatprep.subr.mxu0 0.0
    %183 = vmatpush1.msra.mxu0 0.0
    %184 = vmatprep.subr.mxu0 0.0
    %185 = vmatpush1.msra.mxu0 0.0
    %186 = vmatprep.subr.mxu0 0.0
    %187 = vmatpush1.msra.mxu0 0.0
    %188 = vmatprep.subr.mxu0 0.0
    %189 = vmatpush1.msra.mxu0 0.0
    %190 = vmatprep.subr.mxu0 0.0
    %191 = vmatpush1.msra.mxu0 0.0
    %192 = vmatprep.subr.mxu0 0.0
    %193 = vmatpush1.msra.mxu0 0.0
    %194 = vmatprep.subr.mxu0 0.0
    %195 = vmatpush1.msra.mxu0 0.0
    %196 = vmatprep.subr.mxu0 0.0
    %197 = vmatpush1.msra.mxu0 0.0
    %198 = vmatprep.mubr.f32.mxu0 0.0
    %199 = vmatmul.mubr.f32.gmra.mrb[0].mxu0 %v132
    %v200 = vpop.f32.mrb[0].mxu0
    %v201 = vadd.f32 0.0, %v200
    %v202 = vpop.f32.mrb[0].mxu0
    %203 = vdwg.mxu0
    %v204 = vadd.f32 %v129, %v201
    %v205 = vmul.f32 %v204, %v120
    %v206 = vtanh.pop %v205
    %v207 = vmul.f32 %v120, %v206
    %v208 = vadd.f32 %v121, %v207
    %210 = vrot.lane.b32.xlu0 %v124, 32
    %v211 = vpop.permute.xlu0 %210
    %v213 = vmul.f32 %v208, %v211
    %215 = vrot.lane.b32.xlu0 %v208, 64
    %v216 = vpop.permute.xlu0 %215
    %v218 = vmul.f32 %v208, %v216
    %220 = vrot.lane.b32.xlu0 %v218, 32
    %v221 = vpop.permute.xlu0 %220
    %v223 = vadd.f32 %v213, %v221
    %v224 = vtanh.pop %v223
    %226 = vrot.lane.b32.xlu0 %v224, 64
    %v227 = vpop.permute.xlu0 %226
    %v229 = vmul.f32 %v208, %v227
    %v231 = vrot.slane %v107, 1
    %v233 = vsel %vm128, %v231, %v112
    %235 = vrot.lane.b32.xlu0 %v229, 32
    %v236 = vpop.permute.xlu0 %235
    %v237 = vsel %vm130, %v236, 0
    %239 = vmatprep.subr.mxu0 0.0
    %240 = vmatpush1.msra.mxu0 %v22
    %241 = vmatprep.subr.mxu0 0.0
    %242 = vmatpush1.msra.mxu0 %v23
    %243 = vmatprep.subr.mxu0 0.0
    %244 = vmatpush1.msra.mxu0 %v24
    %245 = vmatprep.subr.mxu0 0.0
    %246 = vmatpush1.msra.mxu0 %v25
    %247 = vmatprep.subr.mxu0 0.0
    %248 = vmatpush1.msra.mxu0 0.0
    %249 = vmatprep.subr.mxu0 0.0
    %250 = vmatpush1.msra.mxu0 0.0
    %251 = vmatprep.subr.mxu0 0.0
    %252 = vmatpush1.msra.mxu0 0.0
    %253 = vmatprep.subr.mxu0 0.0
    %254 = vmatpush1.msra.mxu0 0.0
    %255 = vmatprep.subr.mxu0 0.0
    %256 = vmatpush1.msra.mxu0 0.0
    %257 = vmatprep.subr.mxu0 0.0
    %258 = vmatpush1.msra.mxu0 0.0
    %259 = vmatprep.subr.mxu0 0.0
    %260 = vmatpush1.msra.mxu0 0.0
    %261 = vmatprep.subr.mxu0 0.0
    %262 = vmatpush1.msra.mxu0 0.0
    %263 = vmatprep.subr.mxu0 0.0
    %264 = vmatpush1.msra.mxu0 0.0
    %265 = vmatprep.subr.mxu0 0.0
    %266 = vmatpush1.msra.mxu0 0.0
    %267 = vmatprep.subr.mxu0 0.0
    %268 = vmatpush1.msra.mxu0 0.0
    %269 = vmatprep.subr.mxu0 0.0
    %270 = vmatpush1.msra.mxu0 0.0
    %271 = vmatprep.subr.mxu0 0.0
    %272 = vmatpush1.msra.mxu0 0.0
    %273 = vmatprep.subr.mxu0 0.0
    %274 = vmatpush1.msra.mxu0 0.0
    %275 = vmatprep.subr.mxu0 0.0
    %276 = vmatpush1.msra.mxu0 0.0
    %277 = vmatprep.subr.mxu0 0.0
    %278 = vmatpush1.msra.mxu0 0.0
    %279 = vmatprep.subr.mxu0 0.0
    %280 = vmatpush1.msra.mxu0 0.0
    %281 = vmatprep.subr.mxu0 0.0
    %282 = vmatpush1.msra.mxu0 0.0
    %283 = vmatprep.subr.mxu0 0.0
    %284 = vmatpush1.msra.mxu0 0.0
    %285 = vmatprep.subr.mxu0 0.0
    %286 = vmatpush1.msra.mxu0 0.0
    %287 = vmatprep.subr.mxu0 0.0
    %288 = vmatpush1.msra.mxu0 0.0
    %289 = vmatprep.subr.mxu0 0.0
    %290 = vmatpush1.msra.mxu0 0.0
    %291 = vmatprep.subr.mxu0 0.0
    %292 = vmatpush1.msra.mxu0 0.0
    %293 = vmatprep.subr.mxu0 0.0
    %294 = vmatpush1.msra.mxu0 0.0
    %295 = vmatprep.subr.mxu0 0.0
    %296 = vmatpush1.msra.mxu0 0.0
    %297 = vmatprep.subr.mxu0 0.0
    %298 = vmatpush1.msra.mxu0 0.0
    %299 = vmatprep.subr.mxu0 0.0
    %300 = vmatpush1.msra.mxu0 0.0
    %301 = vmatprep.subr.mxu0 0.0
    %302 = vmatpush1.msra.mxu0 0.0
    %303 = vmatprep.mubr.f32.mxu0 0.0
    %304 = vmatmul.mubr.f32.gmra.mrb[0].mxu0 %v237
    %v305 = vpop.f32.mrb[0].mxu0
    %v306 = vadd.f32 0.0, %v305
    %v307 = vpop.f32.mrb[0].mxu0
    %308 = vdwg.mxu0
    %v309 = vadd.f32 %v233, %v306
    %v310 = vmul.f32 %v309, %v120
    %v311 = vtanh.pop %v310
    %v312 = vmul.f32 %v120, %v311
    %v313 = vadd.f32 %v121, %v312
    %v314 = vmul.f32 %v313, %v223
    %316 = vrot.lane.b32.xlu0 %v313, 64
    %v317 = vpop.permute.xlu0 %316
    %v319 = vmul.f32 %v313, %v317
    %321 = vrot.lane.b32.xlu0 %v319, 32
    %v322 = vpop.permute.xlu0 %321
    %v324 = vadd.f32 %v314, %v322
    %v325 = vtanh.pop %v324
    %327 = vrot.lane.b32.xlu0 %v325, 64
    %v328 = vpop.permute.xlu0 %327
    %v330 = vmul.f32 %v313, %v328
    %v331 = vrot.slane %v107, 2
    %v333 = vrot.slane %v112, 1
    %v335 = vsel %vm128, %v331, %v333
    %337 = vrot.lane.b32.xlu0 %v330, 32
    %v338 = vpop.permute.xlu0 %337
    %v339 = vsel %vm130, %v338, 0
    %341 = vmatprep.subr.mxu0 0.0
    %342 = vmatpush1.msra.mxu0 %v22
    %343 = vmatprep.subr.mxu0 0.0
    %344 = vmatpush1.msra.mxu0 %v23
    %345 = vmatprep.subr.mxu0 0.0
    %346 = vmatpush1.msra.mxu0 %v24
    %347 = vmatprep.subr.mxu0 0.0
    %348 = vmatpush1.msra.mxu0 %v25
    %349 = vmatprep.subr.mxu0 0.0
    %350 = vmatpush1.msra.mxu0 0.0
    %351 = vmatprep.subr.mxu0 0.0
    %352 = vmatpush1.msra.mxu0 0.0
    %353 = vmatprep.subr.mxu0 0.0
    %354 = vmatpush1.msra.mxu0 0.0
    %355 = vmatprep.subr.mxu0 0.0
    %356 = vmatpush1.msra.mxu0 0.0
    %357 = vmatprep.subr.mxu0 0.0
    %358 = vmatpush1.msra.mxu0 0.0
    %359 = vmatprep.subr.mxu0 0.0
    %360 = vmatpush1.msra.mxu0 0.0
    %361 = vmatprep.subr.mxu0 0.0
    %362 = vmatpush1.msra.mxu0 0.0
    %363 = vmatprep.subr.mxu0 0.0
    %364 = vmatpush1.msra.mxu0 0.0
    %365 = vmatprep.subr.mxu0 0.0
    %366 = vmatpush1.msra.mxu0 0.0
    %367 = vmatprep.subr.mxu0 0.0
    %368 = vmatpush1.msra.mxu0 0.0
    %369 = vmatprep.subr.mxu0 0.0
    %370 = vmatpush1.msra.mxu0 0.0
    %371 = vmatprep.subr.mxu0 0.0
    %372 = vmatpush1.msra.mxu0 0.0
    %373 = vmatprep.subr.mxu0 0.0
    %374 = vmatpush1.msra.mxu0 0.0
    %375 = vmatprep.subr.mxu0 0.0
    %376 = vmatpush1.msra.mxu0 0.0
    %377 = vmatprep.subr.mxu0 0.0
    %378 = vmatpush1.msra.mxu0 0.0
    %379 = vmatprep.subr.mxu0 0.0
    %380 = vmatpush1.msra.mxu0 0.0
    %381 = vmatprep.subr.mxu0 0.0
    %382 = vmatpush1.msra.mxu0 0.0
    %383 = vmatprep.subr.mxu0 0.0
    %384 = vmatpush1.msra.mxu0 0.0
    %385 = vmatprep.subr.mxu0 0.0
    %386 = vmatpush1.msra.mxu0 0.0
    %387 = vmatprep.subr.mxu0 0.0
    %388 = vmatpush1.msra.mxu0 0.0
    %389 = vmatprep.subr.mxu0 0.0
    %390 = vmatpush1.msra.mxu0 0.0
    %391 = vmatprep.subr.mxu0 0.0
    %392 = vmatpush1.msra.mxu0 0.0
    %393 = vmatprep.subr.mxu0 0.0
    %394 = vmatpush1.msra.mxu0 0.0
    %395 = vmatprep.subr.mxu0 0.0
    %396 = vmatpush1.msra.mxu0 0.0
    %397 = vmatprep.subr.mxu0 0.0
    %398 = vmatpush1.msra.mxu0 0.0
    %399 = vmatprep.subr.mxu0 0.0
    %400 = vmatpush1.msra.mxu0 0.0
    %401 = vmatprep.subr.mxu0 0.0
    %402 = vmatpush1.msra.mxu0 0.0
    %403 = vmatprep.subr.mxu0 0.0
    %404 = vmatpush1.msra.mxu0 0.0
    %405 = vmatprep.mubr.f32.mxu0 0.0
    %406 = vmatmul.mubr.f32.gmra.mrb[0].mxu0 %v339
    %v407 = vpop.f32.mrb[0].mxu0
    %v408 = vadd.f32 0.0, %v407
    %v409 = vpop.f32.mrb[0].mxu0
    %410 = vdwg.mxu0
    %v411 = vadd.f32 %v335, %v408
    %v412 = vmul.f32 %v411, %v120
    %v413 = vtanh.pop %v412
    %v414 = vmul.f32 %v120, %v413
    %v415 = vadd.f32 %v121, %v414
    %v416 = vmul.f32 %v415, %v324
    %418 = vrot.lane.b32.xlu0 %v415, 64
    %v419 = vpop.permute.xlu0 %418
    %v421 = vmul.f32 %v415, %v419
    %423 = vrot.lane.b32.xlu0 %v421, 32
    %v424 = vpop.permute.xlu0 %423
    %v426 = vadd.f32 %v416, %v424
    %v427 = vtanh.pop %v426
    %429 = vrot.lane.b32.xlu0 %v427, 64
    %v430 = vpop.permute.xlu0 %429
    %v432 = vmul.f32 %v415, %v430
    %v433 = vrot.slane %v107, 3
    %v435 = vrot.slane %v112, 2
    %v437 = vsel %vm128, %v433, %v435
    %439 = vrot.lane.b32.xlu0 %v432, 32
    %v440 = vpop.permute.xlu0 %439
    %v441 = vsel %vm130, %v440, 0
    %443 = vmatprep.subr.mxu0 0.0
    %444 = vmatpush1.msra.mxu0 %v22
    %445 = vmatprep.subr.mxu0 0.0
    %446 = vmatpush1.msra.mxu0 %v23
    %447 = vmatprep.subr.mxu0 0.0
    %448 = vmatpush1.msra.mxu0 %v24
    %449 = vmatprep.subr.mxu0 0.0
    %450 = vmatpush1.msra.mxu0 %v25
    %451 = vmatprep.subr.mxu0 0.0
    %452 = vmatpush1.msra.mxu0 0.0
    %453 = vmatprep.subr.mxu0 0.0
    %454 = vmatpush1.msra.mxu0 0.0
    %455 = vmatprep.subr.mxu0 0.0
    %456 = vmatpush1.msra.mxu0 0.0
    %457 = vmatprep.subr.mxu0 0.0
    %458 = vmatpush1.msra.mxu0 0.0
    %459 = vmatprep.subr.mxu0 0.0
    %460 = vmatpush1.msra.mxu0 0.0
    %461 = vmatprep.subr.mxu0 0.0
    %462 = vmatpush1.msra.mxu0 0.0
    %463 = vmatprep.subr.mxu0 0.0
    %464 = vmatpush1.msra.mxu0 0.0
    %465 = vmatprep.subr.mxu0 0.0
    %466 = vmatpush1.msra.mxu0 0.0
    %467 = vmatprep.subr.mxu0 0.0
    %468 = vmatpush1.msra.mxu0 0.0
    %469 = vmatprep.subr.mxu0 0.0
    %470 = vmatpush1.msra.mxu0 0.0
    %471 = vmatprep.subr.mxu0 0.0
    %472 = vmatpush1.msra.mxu0 0.0
    %473 = vmatprep.subr.mxu0 0.0
    %474 = vmatpush1.msra.mxu0 0.0
    %475 = vmatprep.subr.mxu0 0.0
    %476 = vmatpush1.msra.mxu0 0.0
    %477 = vmatprep.subr.mxu0 0.0
    %478 = vmatpush1.msra.mxu0 0.0
    %479 = vmatprep.subr.mxu0 0.0
    %480 = vmatpush1.msra.mxu0 0.0
    %481 = vmatprep.subr.mxu0 0.0
    %482 = vmatpush1.msra.mxu0 0.0
    %483 = vmatprep.subr.mxu0 0.0
    %484 = vmatpush1.msra.mxu0 0.0
    %485 = vmatprep.subr.mxu0 0.0
    %486 = vmatpush1.msra.mxu0 0.0
    %487 = vmatprep.subr.mxu0 0.0
    %488 = vmatpush1.msra.mxu0 0.0
    %489 = vmatprep.subr.mxu0 0.0
    %490 = vmatpush1.msra.mxu0 0.0
    %491 = vmatprep.subr.mxu0 0.0
    %492 = vmatpush1.msra.mxu0 0.0
    %493 = vmatprep.subr.mxu0 0.0
    %494 = vmatpush1.msra.mxu0 0.0
    %495 = vmatprep.subr.mxu0 0.0
    %496 = vmatpush1.msra.mxu0 0.0
    %497 = vmatprep.subr.mxu0 0.0
    %498 = vmatpush1.msra.mxu0 0.0
    %499 = vmatprep.subr.mxu0 0.0
    %500 = vmatpush1.msra.mxu0 0.0
    %501 = vmatprep.subr.mxu0 0.0
    %502 = vmatpush1.msra.mxu0 0.0
    %503 = vmatprep.subr.mxu0 0.0
    %504 = vmatpush1.msra.mxu0 0.0
    %505 = vmatprep.subr.mxu0 0.0
    %506 = vmatpush1.msra.mxu0 0.0
    %507 = vmatprep.mubr.f32.mxu0 0.0
    %508 = vmatmul.mubr.f32.gmra.mrb[0].mxu0 %v441
    %v509 = vpop.f32.mrb[0].mxu0
    %v510 = vadd.f32 0.0, %v509
    %v511 = vpop.f32.mrb[0].mxu0
    %512 = vdwg.mxu0
    %v513 = vadd.f32 %v437, %v510
    %v514 = vmul.f32 %v513, %v120
    %v515 = vtanh.pop %v514
    %v516 = vmul.f32 %v120, %v515
    %v517 = vadd.f32 %v121, %v516
    %v518 = vmul.f32 %v517, %v426
    %520 = vrot.lane.b32.xlu0 %v517, 64
    %v521 = vpop.permute.xlu0 %520
    %v523 = vmul.f32 %v517, %v521
    %525 = vrot.lane.b32.xlu0 %v523, 32
    %v526 = vpop.permute.xlu0 %525
    %v528 = vadd.f32 %v518, %v526
    %v529 = vtanh.pop %v528
    %531 = vrot.lane.b32.xlu0 %v529, 64
    %v532 = vpop.permute.xlu0 %531
    %v534 = vmul.f32 %v517, %v532
    %v535 = vrot.slane %v107, 4
    %v537 = vrot.slane %v112, 3
    %v539 = vsel %vm128, %v535, %v537
    %541 = vrot.lane.b32.xlu0 %v534, 32
    %v542 = vpop.permute.xlu0 %541
    %v543 = vsel %vm130, %v542, 0
    %545 = vmatprep.subr.mxu0 0.0
    %546 = vmatpush1.msra.mxu0 %v22
    %547 = vmatprep.subr.mxu0 0.0
    %548 = vmatpush1.msra.mxu0 %v23
    %549 = vmatprep.subr.mxu0 0.0
    %550 = vmatpush1.msra.mxu0 %v24
    %551 = vmatprep.subr.mxu0 0.0
    %552 = vmatpush1.msra.mxu0 %v25
    %553 = vmatprep.subr.mxu0 0.0
    %554 = vmatpush1.msra.mxu0 0.0
    %555 = vmatprep.subr.mxu0 0.0
    %556 = vmatpush1.msra.mxu0 0.0
    %557 = vmatprep.subr.mxu0 0.0
    %558 = vmatpush1.msra.mxu0 0.0
    %559 = vmatprep.subr.mxu0 0.0
    %560 = vmatpush1.msra.mxu0 0.0
    %561 = vmatprep.subr.mxu0 0.0
    %562 = vmatpush1.msra.mxu0 0.0
    %563 = vmatprep.subr.mxu0 0.0
    %564 = vmatpush1.msra.mxu0 0.0
    %565 = vmatprep.subr.mxu0 0.0
    %566 = vmatpush1.msra.mxu0 0.0
    %567 = vmatprep.subr.mxu0 0.0
    %568 = vmatpush1.msra.mxu0 0.0
    %569 = vmatprep.subr.mxu0 0.0
    %570 = vmatpush1.msra.mxu0 0.0
    %571 = vmatprep.subr.mxu0 0.0
    %572 = vmatpush1.msra.mxu0 0.0
    %573 = vmatprep.subr.mxu0 0.0
    %574 = vmatpush1.msra.mxu0 0.0
    %575 = vmatprep.subr.mxu0 0.0
    %576 = vmatpush1.msra.mxu0 0.0
    %577 = vmatprep.subr.mxu0 0.0
    %578 = vmatpush1.msra.mxu0 0.0
    %579 = vmatprep.subr.mxu0 0.0
    %580 = vmatpush1.msra.mxu0 0.0
    %581 = vmatprep.subr.mxu0 0.0
    %582 = vmatpush1.msra.mxu0 0.0
    %583 = vmatprep.subr.mxu0 0.0
    %584 = vmatpush1.msra.mxu0 0.0
    %585 = vmatprep.subr.mxu0 0.0
    %586 = vmatpush1.msra.mxu0 0.0
    %587 = vmatprep.subr.mxu0 0.0
    %588 = vmatpush1.msra.mxu0 0.0
    %589 = vmatprep.subr.mxu0 0.0
    %590 = vmatpush1.msra.mxu0 0.0
    %591 = vmatprep.subr.mxu0 0.0
    %592 = vmatpush1.msra.mxu0 0.0
    %593 = vmatprep.subr.mxu0 0.0
    %594 = vmatpush1.msra.mxu0 0.0
    %595 = vmatprep.subr.mxu0 0.0
    %596 = vmatpush1.msra.mxu0 0.0
    %597 = vmatprep.subr.mxu0 0.0
    %598 = vmatpush1.msra.mxu0 0.0
    %599 = vmatprep.subr.mxu0 0.0
    %600 = vmatpush1.msra.mxu0 0.0
    %601 = vmatprep.subr.mxu0 0.0
    %602 = vmatpush1.msra.mxu0 0.0
    %603 = vmatprep.subr.mxu0 0.0
    %604 = vmatpush1.msra.mxu0 0.0
    %605 = vmatprep.subr.mxu0 0.0
    %606 = vmatpush1.msra.mxu0 0.0
    %607 = vmatprep.subr.mxu0 0.0
    %608 = vmatpush1.msra.mxu0 0.0
    %609 = vmatprep.mubr.f32.mxu0 0.0
    %610 = vmatmul.mubr.f32.gmra.mrb[0].mxu0 %v543
    %v611 = vpop.f32.mrb[0].mxu0
    %v612 = vadd.f32 0.0, %v611
    %v613 = vpop.f32.mrb[0].mxu0
    %614 = vdwg.mxu0
    %v615 = vadd.f32 %v539, %v612
    %v616 = vmul.f32 %v615, %v120
    %v617 = vtanh.pop %v616
    %v618 = vmul.f32 %v120, %v617
    %v619 = vadd.f32 %v121, %v618
    %v620 = vmul.f32 %v619, %v528
    %622 = vrot.lane.b32.xlu0 %v619, 64
    %v623 = vpop.permute.xlu0 %622
    %v625 = vmul.f32 %v619, %v623
    %627 = vrot.lane.b32.xlu0 %v625, 32
    %v628 = vpop.permute.xlu0 %627
    %v630 = vadd.f32 %v620, %v628
    %v631 = vtanh.pop %v630
    %633 = vrot.lane.b32.xlu0 %v631, 64
    %v634 = vpop.permute.xlu0 %633
    %v636 = vmul.f32 %v619, %v634
    %v637 = vrot.slane %v107, 5
    %v639 = vrot.slane %v112, 4
    %v641 = vsel %vm128, %v637, %v639
    %643 = vrot.lane.b32.xlu0 %v636, 32
    %v644 = vpop.permute.xlu0 %643
    %v645 = vsel %vm130, %v644, 0
    %647 = vmatprep.subr.mxu0 0.0
    %648 = vmatpush1.msra.mxu0 %v22
    %649 = vmatprep.subr.mxu0 0.0
    %650 = vmatpush1.msra.mxu0 %v23
    %651 = vmatprep.subr.mxu0 0.0
    %652 = vmatpush1.msra.mxu0 %v24
    %653 = vmatprep.subr.mxu0 0.0
    %654 = vmatpush1.msra.mxu0 %v25
    %655 = vmatprep.subr.mxu0 0.0
    %656 = vmatpush1.msra.mxu0 0.0
    %657 = vmatprep.subr.mxu0 0.0
    %658 = vmatpush1.msra.mxu0 0.0
    %659 = vmatprep.subr.mxu0 0.0
    %660 = vmatpush1.msra.mxu0 0.0
    %661 = vmatprep.subr.mxu0 0.0
    %662 = vmatpush1.msra.mxu0 0.0
    %663 = vmatprep.subr.mxu0 0.0
    %664 = vmatpush1.msra.mxu0 0.0
    %665 = vmatprep.subr.mxu0 0.0
    %666 = vmatpush1.msra.mxu0 0.0
    %667 = vmatprep.subr.mxu0 0.0
    %668 = vmatpush1.msra.mxu0 0.0
    %669 = vmatprep.subr.mxu0 0.0
    %670 = vmatpush1.msra.mxu0 0.0
    %671 = vmatprep.subr.mxu0 0.0
    %672 = vmatpush1.msra.mxu0 0.0
    %673 = vmatprep.subr.mxu0 0.0
    %674 = vmatpush1.msra.mxu0 0.0
    %675 = vmatprep.subr.mxu0 0.0
    %676 = vmatpush1.msra.mxu0 0.0
    %677 = vmatprep.subr.mxu0 0.0
    %678 = vmatpush1.msra.mxu0 0.0
    %679 = vmatprep.subr.mxu0 0.0
    %680 = vmatpush1.msra.mxu0 0.0
    %681 = vmatprep.subr.mxu0 0.0
    %682 = vmatpush1.msra.mxu0 0.0
    %683 = vmatprep.subr.mxu0 0.0
    %684 = vmatpush1.msra.mxu0 0.0
    %685 = vmatprep.subr.mxu0 0.0
    %686 = vmatpush1.msra.mxu0 0.0
    %687 = vmatprep.subr.mxu0 0.0
    %688 = vmatpush1.msra.mxu0 0.0
    %689 = vmatprep.subr.mxu0 0.0
    %690 = vmatpush1.msra.mxu0 0.0
    %691 = vmatprep.subr.mxu0 0.0
    %692 = vmatpush1.msra.mxu0 0.0
    %693 = vmatprep.subr.mxu0 0.0
    %694 = vmatpush1.msra.mxu0 0.0
    %695 = vmatprep.subr.mxu0 0.0
    %696 = vmatpush1.msra.mxu0 0.0
    %697 = vmatprep.subr.mxu0 0.0
    %698 = vmatpush1.msra.mxu0 0.0
    %699 = vmatprep.subr.mxu0 0.0
    %700 = vmatpush1.msra.mxu0 0.0
    %701 = vmatprep.subr.mxu0 0.0
    %702 = vmatpush1.msra.mxu0 0.0
    %703 = vmatprep.subr.mxu0 0.0
    %704 = vmatpush1.msra.mxu0 0.0
    %705 = vmatprep.subr.mxu0 0.0
    %706 = vmatpush1.msra.mxu0 0.0
    %707 = vmatprep.subr.mxu0 0.0
    %708 = vmatpush1.msra.mxu0 0.0
    %709 = vmatprep.subr.mxu0 0.0
    %710 = vmatpush1.msra.mxu0 0.0
    %711 = vmatprep.mubr.f32.mxu0 0.0
    %712 = vmatmul.mubr.f32.gmra.mrb[0].mxu0 %v645
    %v713 = vpop.f32.mrb[0].mxu0
    %v714 = vadd.f32 0.0, %v713
    %v715 = vpop.f32.mrb[0].mxu0
    %716 = vdwg.mxu0
    %v717 = vadd.f32 %v641, %v714
    %v718 = vmul.f32 %v717, %v120
    %v719 = vtanh.pop %v718
    %v720 = vmul.f32 %v120, %v719
    %v721 = vadd.f32 %v121, %v720
    %v722 = vmul.f32 %v721, %v630
    %724 = vrot.lane.b32.xlu0 %v721, 64
    %v725 = vpop.permute.xlu0 %724
    %v727 = vmul.f32 %v721, %v725
    %729 = vrot.lane.b32.xlu0 %v727, 32
    %v730 = vpop.permute.xlu0 %729
    %v732 = vadd.f32 %v722, %v730
    %v733 = vtanh.pop %v732
    %735 = vrot.lane.b32.xlu0 %v733, 64
    %v736 = vpop.permute.xlu0 %735
    %v738 = vmul.f32 %v721, %v736
    %v739 = vrot.slane %v107, 6
    %v741 = vrot.slane %v112, 5
    %v743 = vsel %vm128, %v739, %v741
    %745 = vrot.lane.b32.xlu0 %v738, 32
    %v746 = vpop.permute.xlu0 %745
    %v747 = vsel %vm130, %v746, 0
    %749 = vmatprep.subr.mxu0 0.0
    %750 = vmatpush1.msra.mxu0 %v22
    %751 = vmatprep.subr.mxu0 0.0
    %752 = vmatpush1.msra.mxu0 %v23
    %753 = vmatprep.subr.mxu0 0.0
    %754 = vmatpush1.msra.mxu0 %v24
    %755 = vmatprep.subr.mxu0 0.0
    %756 = vmatpush1.msra.mxu0 %v25
    %757 = vmatprep.subr.mxu0 0.0
    %758 = vmatpush1.msra.mxu0 0.0
    %759 = vmatprep.subr.mxu0 0.0
    %760 = vmatpush1.msra.mxu0 0.0
    %761 = vmatprep.subr.mxu0 0.0
    %762 = vmatpush1.msra.mxu0 0.0
    %763 = vmatprep.subr.mxu0 0.0
    %764 = vmatpush1.msra.mxu0 0.0
    %765 = vmatprep.subr.mxu0 0.0
    %766 = vmatpush1.msra.mxu0 0.0
    %767 = vmatprep.subr.mxu0 0.0
    %768 = vmatpush1.msra.mxu0 0.0
    %769 = vmatprep.subr.mxu0 0.0
    %770 = vmatpush1.msra.mxu0 0.0
    %771 = vmatprep.subr.mxu0 0.0
    %772 = vmatpush1.msra.mxu0 0.0
    %773 = vmatprep.subr.mxu0 0.0
    %774 = vmatpush1.msra.mxu0 0.0
    %775 = vmatprep.subr.mxu0 0.0
    %776 = vmatpush1.msra.mxu0 0.0
    %777 = vmatprep.subr.mxu0 0.0
    %778 = vmatpush1.msra.mxu0 0.0
    %779 = vmatprep.subr.mxu0 0.0
    %780 = vmatpush1.msra.mxu0 0.0
    %781 = vmatprep.subr.mxu0 0.0
    %782 = vmatpush1.msra.mxu0 0.0
    %783 = vmatprep.subr.mxu0 0.0
    %784 = vmatpush1.msra.mxu0 0.0
    %785 = vmatprep.subr.mxu0 0.0
    %786 = vmatpush1.msra.mxu0 0.0
    %787 = vmatprep.subr.mxu0 0.0
    %788 = vmatpush1.msra.mxu0 0.0
    %789 = vmatprep.subr.mxu0 0.0
    %790 = vmatpush1.msra.mxu0 0.0
    %791 = vmatprep.subr.mxu0 0.0
    %792 = vmatpush1.msra.mxu0 0.0
    %793 = vmatprep.subr.mxu0 0.0
    %794 = vmatpush1.msra.mxu0 0.0
    %795 = vmatprep.subr.mxu0 0.0
    %796 = vmatpush1.msra.mxu0 0.0
    %797 = vmatprep.subr.mxu0 0.0
    %798 = vmatpush1.msra.mxu0 0.0
    %799 = vmatprep.subr.mxu0 0.0
    %800 = vmatpush1.msra.mxu0 0.0
    %801 = vmatprep.subr.mxu0 0.0
    %802 = vmatpush1.msra.mxu0 0.0
    %803 = vmatprep.subr.mxu0 0.0
    %804 = vmatpush1.msra.mxu0 0.0
    %805 = vmatprep.subr.mxu0 0.0
    %806 = vmatpush1.msra.mxu0 0.0
    %807 = vmatprep.subr.mxu0 0.0
    %808 = vmatpush1.msra.mxu0 0.0
    %809 = vmatprep.subr.mxu0 0.0
    %810 = vmatpush1.msra.mxu0 0.0
    %811 = vmatprep.subr.mxu0 0.0
    %812 = vmatpush1.msra.mxu0 0.0
    %813 = vmatprep.mubr.f32.mxu0 0.0
    %814 = vmatmul.mubr.f32.gmra.mrb[0].mxu0 %v747
    %v815 = vpop.f32.mrb[0].mxu0
    %v816 = vadd.f32 0.0, %v815
    %v817 = vpop.f32.mrb[0].mxu0
    %818 = vdwg.mxu0
    %v819 = vadd.f32 %v743, %v816
    %v820 = vmul.f32 %v819, %v120
    %v821 = vtanh.pop %v820
    %v822 = vmul.f32 %v120, %v821
    %v823 = vadd.f32 %v121, %v822
    %v824 = vmul.f32 %v823, %v732
    %826 = vrot.lane.b32.xlu0 %v823, 64
    %v827 = vpop.permute.xlu0 %826
    %v829 = vmul.f32 %v823, %v827
    %831 = vrot.lane.b32.xlu0 %v829, 32
    %v832 = vpop.permute.xlu0 %831
    %v834 = vadd.f32 %v824, %v832
    %v835 = vtanh.pop %v834
    %837 = vrot.lane.b32.xlu0 %v835, 64
    %v838 = vpop.permute.xlu0 %837
    %v840 = vmul.f32 %v823, %v838
    %v841 = vrot.slane %v107, 7
    %v843 = vrot.slane %v112, 6
    %v845 = vsel %vm128, %v841, %v843
    %847 = vrot.lane.b32.xlu0 %v840, 32
    %v848 = vpop.permute.xlu0 %847
    %v849 = vsel %vm130, %v848, 0
    %851 = vmatprep.subr.mxu0 0.0
    %852 = vmatpush1.msra.mxu0 %v22
    %853 = vmatprep.subr.mxu0 0.0
    %854 = vmatpush1.msra.mxu0 %v23
    %855 = vmatprep.subr.mxu0 0.0
    %856 = vmatpush1.msra.mxu0 %v24
    %857 = vmatprep.subr.mxu0 0.0
    %858 = vmatpush1.msra.mxu0 %v25
    %859 = vmatprep.subr.mxu0 0.0
    %860 = vmatpush1.msra.mxu0 0.0
    %861 = vmatprep.subr.mxu0 0.0
    %862 = vmatpush1.msra.mxu0 0.0
    %863 = vmatprep.subr.mxu0 0.0
    %864 = vmatpush1.msra.mxu0 0.0
    %865 = vmatprep.subr.mxu0 0.0
    %866 = vmatpush1.msra.mxu0 0.0
    %867 = vmatprep.subr.mxu0 0.0
    %868 = vmatpush1.msra.mxu0 0.0
    %869 = vmatprep.subr.mxu0 0.0
    %870 = vmatpush1.msra.mxu0 0.0
    %871 = vmatprep.subr.mxu0 0.0
    %872 = vmatpush1.msra.mxu0 0.0
    %873 = vmatprep.subr.mxu0 0.0
    %874 = vmatpush1.msra.mxu0 0.0
    %875 = vmatprep.subr.mxu0 0.0
    %876 = vmatpush1.msra.mxu0 0.0
    %877 = vmatprep.subr.mxu0 0.0
    %878 = vmatpush1.msra.mxu0 0.0
    %879 = vmatprep.subr.mxu0 0.0
    %880 = vmatpush1.msra.mxu0 0.0
    %881 = vmatprep.subr.mxu0 0.0
    %882 = vmatpush1.msra.mxu0 0.0
    %883 = vmatprep.subr.mxu0 0.0
    %884 = vmatpush1.msra.mxu0 0.0
    %885 = vmatprep.subr.mxu0 0.0
    %886 = vmatpush1.msra.mxu0 0.0
    %887 = vmatprep.subr.mxu0 0.0
    %888 = vmatpush1.msra.mxu0 0.0
    %889 = vmatprep.subr.mxu0 0.0
    %890 = vmatpush1.msra.mxu0 0.0
    %891 = vmatprep.subr.mxu0 0.0
    %892 = vmatpush1.msra.mxu0 0.0
    %893 = vmatprep.subr.mxu0 0.0
    %894 = vmatpush1.msra.mxu0 0.0
    %895 = vmatprep.subr.mxu0 0.0
    %896 = vmatpush1.msra.mxu0 0.0
    %897 = vmatprep.subr.mxu0 0.0
    %898 = vmatpush1.msra.mxu0 0.0
    %899 = vmatprep.subr.mxu0 0.0
    %900 = vmatpush1.msra.mxu0 0.0
    %901 = vmatprep.subr.mxu0 0.0
    %902 = vmatpush1.msra.mxu0 0.0
    %903 = vmatprep.subr.mxu0 0.0
    %904 = vmatpush1.msra.mxu0 0.0
    %905 = vmatprep.subr.mxu0 0.0
    %906 = vmatpush1.msra.mxu0 0.0
    %907 = vmatprep.subr.mxu0 0.0
    %908 = vmatpush1.msra.mxu0 0.0
    %909 = vmatprep.subr.mxu0 0.0
    %910 = vmatpush1.msra.mxu0 0.0
    %911 = vmatprep.subr.mxu0 0.0
    %912 = vmatpush1.msra.mxu0 0.0
    %913 = vmatprep.subr.mxu0 0.0
    %914 = vmatpush1.msra.mxu0 0.0
    %915 = vmatprep.mubr.f32.mxu0 0.0
    %916 = vmatmul.mubr.f32.gmra.mrb[0].mxu0 %v849
    %v917 = vpop.f32.mrb[0].mxu0
    %v918 = vadd.f32 0.0, %v917
    %v919 = vpop.f32.mrb[0].mxu0
    %920 = vdwg.mxu0
    %v921 = vadd.f32 %v845, %v918
    %v922 = vmul.f32 %v921, %v120
    %v923 = vtanh.pop %v922
    %v924 = vmul.f32 %v120, %v923
    %v925 = vadd.f32 %v121, %v924
    %v926 = vmul.f32 %v925, %v834
    %928 = vrot.lane.b32.xlu0 %v925, 64
    %v929 = vpop.permute.xlu0 %928
    %v931 = vmul.f32 %v925, %v929
    %933 = vrot.lane.b32.xlu0 %v931, 32
    %v934 = vpop.permute.xlu0 %933
    %v936 = vadd.f32 %v926, %v934
    %v937 = vtanh.pop %v936
    %939 = vrot.lane.b32.xlu0 %v937, 64
    %v940 = vpop.permute.xlu0 %939
    %v942 = vmul.f32 %v925, %v940
    %944 = vrot.lane.b32.xlu0 %v942, 32
    %v945 = vpop.permute.xlu0 %944
    %vm947 = vcmask 254976
    %948 = vst.msk [vmem:[%s5] sm:$0x3] %vm947, %v945
    %950 = vrot.lane.b32.xlu0 %v936, 96
    %v951 = vpop.permute.xlu0 %950
    %s953 = scalar_lea.vmem %s5, 2
    %954 = vst.msk [vmem:[%s953] sm:$0x3] %vm947, %v951
    %v955 = vrot.slane %v330, 7
    %v957 = vrot.slane %v432, 6
    %v959 = vrot.slane %v534, 5
    %v961 = vrot.slane %v636, 4
    %v963 = vrot.slane %v738, 3
    %v965 = vrot.slane %v840, 2
    %v967 = vrot.slane %v942, 1
    %v969 = vsel %vm128, %v229, %v955
    %vm970 = vcmask 1041408
    %v971 = vsel %vm970, %v969, %v957
    %vm972 = vcmask 1042432
    %v973 = vsel %vm972, %v971, %v959
    %vm974 = vcmask 1043456
    %v975 = vsel %vm974, %v973, %v961
    %vm976 = vcmask 1044480
    %v977 = vsel %vm976, %v975, %v963
    %vm978 = vcmask 1045504
    %v979 = vsel %vm978, %v977, %v965
    %vm980 = vcmask 1046528
    %v981 = vsel %vm980, %v979, %v967
    %v982 = vrot.slane %v229, 1
    %v984 = vrot.slane %v432, 7
    %v986 = vrot.slane %v534, 6
    %v988 = vrot.slane %v636, 5
    %v990 = vrot.slane %v738, 4
    %v992 = vrot.slane %v840, 3
    %v994 = vrot.slane %v942, 2
    %v996 = vsel %vm128, %v982, %v330
    %v997 = vsel %vm970, %v996, %v984
    %v998 = vsel %vm972, %v997, %v986
    %v999 = vsel %vm974, %v998, %v988
    %v1000 = vsel %vm976, %v999, %v990
    %v1001 = vsel %vm978, %v1000, %v992
    %v1002 = vsel %vm980, %v1001, %v994
    %v1003 = vld [vmem:[%s3] sm:$0xff]
    %v1004 = vld [vmem:[%s3 + $0x8] sm:$0xff]
    %v1005 = vld [vmem:[%s3 + $0x10] sm:$0xff]
    %v1006 = vld [vmem:[%s3 + $0x18] sm:$0xff]
    %v1007 = vld [vmem:[%s3 + $0x20] sm:$0x1]
    %v1008 = vld [vmem:[%s3 + $0x28] sm:$0xff]
    %v1009 = vld [vmem:[%s3 + $0x30] sm:$0xff]
    %v1010 = vld [vmem:[%s3 + $0x38] sm:$0x1]
    %v1011 = vlaneseq
    %v1012 = vshrl.u32 %v1011, 7
    %v1013 = vsub.s32 0, %v1012
    %v1014 = vrot.slane %v1007, %v1013
    %1017 = vrot.lane.b32.xlu0 %v981, 32
    %v1018 = vpop.permute.xlu0 %1017
    %1019 = vrot.lane.b32.xlu0 %v1002, 32
    %v1020 = vpop.permute.xlu0 %1019
    %v1021 = vsel %vm130, %v1018, 0
    %v1023 = vsel %vm130, %v1020, 0
    %1025 = vmatprep.subr.mxu0 0.0
    %1026 = vmatpush1.msra.mxu0 %v1003
    %1027 = vmatprep.subr.mxu0 0.0
    %1028 = vmatpush1.msra.mxu0 %v1004
    %1029 = vmatprep.subr.mxu0 0.0
    %1030 = vmatpush1.msra.mxu0 %v1005
    %1031 = vmatprep.subr.mxu0 0.0
    %1032 = vmatpush1.msra.mxu0 %v1006
    %1033 = vmatprep.subr.mxu0 0.0
    %1034 = vmatpush1.msra.mxu0 0.0
    %1035 = vmatprep.subr.mxu0 0.0
    %1036 = vmatpush1.msra.mxu0 0.0
    %1037 = vmatprep.subr.mxu0 0.0
    %1038 = vmatpush1.msra.mxu0 0.0
    %1039 = vmatprep.subr.mxu0 0.0
    %1040 = vmatpush1.msra.mxu0 0.0
    %1041 = vmatprep.subr.mxu0 0.0
    %1042 = vmatpush1.msra.mxu0 0.0
    %1043 = vmatprep.subr.mxu0 0.0
    %1044 = vmatpush1.msra.mxu0 0.0
    %1045 = vmatprep.subr.mxu0 0.0
    %1046 = vmatpush1.msra.mxu0 0.0
    %1047 = vmatprep.subr.mxu0 0.0
    %1048 = vmatpush1.msra.mxu0 0.0
    %1049 = vmatprep.subr.mxu0 0.0
    %1050 = vmatpush1.msra.mxu0 0.0
    %1051 = vmatprep.subr.mxu0 0.0
    %1052 = vmatpush1.msra.mxu0 0.0
    %1053 = vmatprep.subr.mxu0 0.0
    %1054 = vmatpush1.msra.mxu0 0.0
    %1055 = vmatprep.subr.mxu0 0.0
    %1056 = vmatpush1.msra.mxu0 0.0
    %1057 = vmatprep.subr.mxu0 0.0
    %1058 = vmatpush1.msra.mxu0 0.0
    %1059 = vmatprep.subr.mxu0 0.0
    %1060 = vmatpush1.msra.mxu0 0.0
    %1061 = vmatprep.subr.mxu0 0.0
    %1062 = vmatpush1.msra.mxu0 0.0
    %1063 = vmatprep.subr.mxu0 0.0
    %1064 = vmatpush1.msra.mxu0 0.0
    %1065 = vmatprep.subr.mxu0 0.0
    %1066 = vmatpush1.msra.mxu0 0.0
    %1067 = vmatprep.subr.mxu0 0.0
    %1068 = vmatpush1.msra.mxu0 0.0
    %1069 = vmatprep.subr.mxu0 0.0
    %1070 = vmatpush1.msra.mxu0 0.0
    %1071 = vmatprep.subr.mxu0 0.0
    %1072 = vmatpush1.msra.mxu0 0.0
    %1073 = vmatprep.subr.mxu0 0.0
    %1074 = vmatpush1.msra.mxu0 0.0
    %1075 = vmatprep.subr.mxu0 0.0
    %1076 = vmatpush1.msra.mxu0 0.0
    %1077 = vmatprep.subr.mxu0 0.0
    %1078 = vmatpush1.msra.mxu0 0.0
    %1079 = vmatprep.subr.mxu0 0.0
    %1080 = vmatpush1.msra.mxu0 0.0
    %1081 = vmatprep.subr.mxu0 0.0
    %1082 = vmatpush1.msra.mxu0 0.0
    %1083 = vmatprep.subr.mxu0 0.0
    %1084 = vmatpush1.msra.mxu0 0.0
    %1085 = vmatprep.subr.mxu0 0.0
    %1086 = vmatpush1.msra.mxu0 0.0
    %1087 = vmatprep.subr.mxu0 0.0
    %1088 = vmatpush1.msra.mxu0 0.0
    %1089 = vmatprep.mubr.f32.mxu0 0.0
    %1090 = vmatmul.mubr.f32.gmra.mrb[0].mxu0 %v1021
    %v1091 = vpop.f32.mrb[0].mxu0
    %v1092 = vadd.f32 %v1014, %v1091
    %v1093 = vpop.f32.mrb[0].mxu0
    %1094 = vmatprep.mubr.f32.mxu0 0.0
    %1095 = vmatmul.mubr.f32.gmra.mrb[0].mxu0 %v1023
    %v1096 = vpop.f32.mrb[0].mxu0
    %v1097 = vadd.f32 %v1014, %v1096
    %v1098 = vpop.f32.mrb[0].mxu0
    %1099 = vdwg.mxu0
    %v1100 = vmax.f32 %v1092, 0.0
    %v1101 = vmax.f32 %v1097, 0.0
    %v1102 = vlaneseq
    %v1103 = vshrl.u32 %v1102, 7
    %v1104 = vsub.s32 0, %v1103
    %v1105 = vrot.slane %v1010, %v1104
    %v1107 = vsel %vm33, %v1100, 0
    %v1110 = vsel %vm33, %v1101, 0
    %1112 = vmatprep.subr.mxu0 0.0
    %1113 = vmatpush1.msra.mxu0 %v1008
    %1114 = vmatprep.subr.mxu0 0.0
    %1115 = vmatpush1.msra.mxu0 %v1009
    %1116 = vmatprep.subr.mxu0 0.0
    %1117 = vmatpush1.msra.mxu0 0.0
    %1118 = vmatprep.subr.mxu0 0.0
    %1119 = vmatpush1.msra.mxu0 0.0
    %1120 = vmatprep.subr.mxu0 0.0
    %1121 = vmatpush1.msra.mxu0 0.0
    %1122 = vmatprep.subr.mxu0 0.0
    %1123 = vmatpush1.msra.mxu0 0.0
    %1124 = vmatprep.subr.mxu0 0.0
    %1125 = vmatpush1.msra.mxu0 0.0
    %1126 = vmatprep.subr.mxu0 0.0
    %1127 = vmatpush1.msra.mxu0 0.0
    %1128 = vmatprep.subr.mxu0 0.0
    %1129 = vmatpush1.msra.mxu0 0.0
    %1130 = vmatprep.subr.mxu0 0.0
    %1131 = vmatpush1.msra.mxu0 0.0
    %1132 = vmatprep.subr.mxu0 0.0
    %1133 = vmatpush1.msra.mxu0 0.0
    %1134 = vmatprep.subr.mxu0 0.0
    %1135 = vmatpush1.msra.mxu0 0.0
    %1136 = vmatprep.subr.mxu0 0.0
    %1137 = vmatpush1.msra.mxu0 0.0
    %1138 = vmatprep.subr.mxu0 0.0
    %1139 = vmatpush1.msra.mxu0 0.0
    %1140 = vmatprep.subr.mxu0 0.0
    %1141 = vmatpush1.msra.mxu0 0.0
    %1142 = vmatprep.subr.mxu0 0.0
    %1143 = vmatpush1.msra.mxu0 0.0
    %1144 = vmatprep.subr.mxu0 0.0
    %1145 = vmatpush1.msra.mxu0 0.0
    %1146 = vmatprep.subr.mxu0 0.0
    %1147 = vmatpush1.msra.mxu0 0.0
    %1148 = vmatprep.subr.mxu0 0.0
    %1149 = vmatpush1.msra.mxu0 0.0
    %1150 = vmatprep.subr.mxu0 0.0
    %1151 = vmatpush1.msra.mxu0 0.0
    %1152 = vmatprep.subr.mxu0 0.0
    %1153 = vmatpush1.msra.mxu0 0.0
    %1154 = vmatprep.subr.mxu0 0.0
    %1155 = vmatpush1.msra.mxu0 0.0
    %1156 = vmatprep.subr.mxu0 0.0
    %1157 = vmatpush1.msra.mxu0 0.0
    %1158 = vmatprep.subr.mxu0 0.0
    %1159 = vmatpush1.msra.mxu0 0.0
    %1160 = vmatprep.subr.mxu0 0.0
    %1161 = vmatpush1.msra.mxu0 0.0
    %1162 = vmatprep.subr.mxu0 0.0
    %1163 = vmatpush1.msra.mxu0 0.0
    %1164 = vmatprep.subr.mxu0 0.0
    %1165 = vmatpush1.msra.mxu0 0.0
    %1166 = vmatprep.subr.mxu0 0.0
    %1167 = vmatpush1.msra.mxu0 0.0
    %1168 = vmatprep.subr.mxu0 0.0
    %1169 = vmatpush1.msra.mxu0 0.0
    %1170 = vmatprep.subr.mxu0 0.0
    %1171 = vmatpush1.msra.mxu0 0.0
    %1172 = vmatprep.subr.mxu0 0.0
    %1173 = vmatpush1.msra.mxu0 0.0
    %1174 = vmatprep.subr.mxu0 0.0
    %1175 = vmatpush1.msra.mxu0 0.0
    %1176 = vmatprep.mubr.f32.mxu0 0.0
    %1177 = vmatmul.mubr.f32.gmra.mrb[0].mxu0 %v1107
    %v1178 = vpop.f32.mrb[0].mxu0
    %v1179 = vadd.f32 %v1105, %v1178
    %v1180 = vpop.f32.mrb[0].mxu0
    %1181 = vmatprep.mubr.f32.mxu0 0.0
    %1182 = vmatmul.mubr.f32.gmra.mrb[0].mxu0 %v1110
    %v1183 = vpop.f32.mrb[0].mxu0
    %v1184 = vadd.f32 %v1105, %v1183
    %v1185 = vpop.f32.mrb[0].mxu0
    %1186 = vdwg.mxu0
    %1187 = vst.msk [vmem:[#allocation2] sm:$0xff] %vm33, %v1179
    %1188 = vst.msk [vmem:[#allocation2 + $0x8] sm:$0xff] %vm33, %v1184
    // Predicated region
    $region18: #{model_forward.1} parent=1 // pred_check
      _
    $region19: #{model_forward.1} parent=1 // pred_check_branch
      %1190 = sbr.rel (0) target = $region21
    $region20: #{model_forward.1} parent=1 // pred_region
      %s1192 = ssub.s32 256, 256
      %1193 = vsyncadd [#allocation3], %s1192
      %s1194 = sshll.u32 [#allocation2], 4
      %s1195 = int_to_ptr.vmem [resolvable:$true] %s1194
      %1200 = dma.vmem_to_hbm [thread:$0]  %s1195, 256, %s4, [#allocation3], 128, 128, 8
    $region21: #{model_forward.1} parent=1 // pred_fallthru
      _
    // Predicated region
    $region22: #{model_forward.1} parent=1 // pred_check
      _
    $region23: #{model_forward.1} parent=1 // pred_check_branch
      %1202 = sbr.rel (0) target = $region25
    $region24: #{model_forward.1} parent=1 // pred_region
      _
    $region25: #{model_forward.1} parent=1 // pred_fallthru
      _
    // Predicated region
    $region26: #{model_forward.1} parent=1 // pred_check
      _
    $region27: #{model_forward.1} parent=1 // pred_check_branch
      %1204 = sbr.rel (0) target = $region29
    $region28: #{model_forward.1} parent=1 // pred_region
      %1205 = dma.done [#allocation3], 256
    $region29: #{model_forward.1} parent=1 // pred_fallthru
      _
    // Predicated region
    $region30: #{model_forward.1} parent=1 // pred_check
      _
    $region31: #{model_forward.1} parent=1 // pred_check_branch
      %1207 = sbr.rel (0) target = $region33
    $region32: #{model_forward.1} parent=1 // pred_region
      _
    $region33: #{model_forward.1} parent=1 // pred_fallthru
      _
    %1208 = vsyncpa [#allocation3], 1

</llo_original>
